<compile_context>
chip_gen: v7x
topology: tpu7x:2x2x1
jax: 0.10.0
libtpu: 0.0.40
codegen_flags: <defaults>
</compile_context>

<pallas_src>
import functools

import numpy as np

import jax
import jax.numpy as jnp
from jax import lax
from jax.experimental import pallas as pl
from jax.experimental.pallas import tpu as pltpu


def _round_up(a, b):
    return -(-a // b) * b


def convgru_kernel(x_ref, h_ref, mask_ref, w1_ref, w2_ref, bzr_ref, bh_ref,
                   out_ref, col_xh_ref, col_rh_ref, *,
                   k, pad, W, Ch, tap_pad, ch_pad, compute_dtype):
    """One ConvGRU step for one image, channels-on-sublanes / pixels-on-lanes.

    x_ref:      (Cx, L)               L = H*W flattened on the lane axis
    h_ref:      (Ch, L)
    mask_ref:   (k*k, L)              {0,1} per-tap in-bounds ("same" pad) masks
    w1_ref:     (3*Ch, k*k*tap_pad)   [conv_zr ; conv_h x-part] im2col weights
    w2_ref:     (Ch,   k*k*ch_pad)    conv_h (r*h)-part im2col weights
    bzr_ref:    (2*Ch, 1), bh_ref: (Ch, 1)
    out_ref:    (Ch, L)               new hidden state
    col_*_ref:  VMEM im2col scratch slabs
    """
    f32 = jnp.float32
    L = out_ref.shape[-1]
    Cx = x_ref.shape[0]
    taps = [(ky - pad, kx - pad) for ky in range(k) for kx in range(k)]

    if compute_dtype == f32:
        # Exact-parity path: full f32 MXU contraction.
        def dot(a, b):
            return jnp.dot(a, b, precision=lax.Precision.HIGHEST,
                           preferred_element_type=f32)
    else:
        # Fast path: bf16 products (native single MXU pass), f32 accumulation.
        def dot(a, b):
            return jnp.dot(a.astype(compute_dtype), b.astype(compute_dtype),
                           preferred_element_type=f32)

    def fill_im2col(col_ref, v, stride):
        # v: (stride, L).  For each tap, shift all channels by dy*W+dx lanes
        # (XLU roll -- free slot) and zero positions whose 3x3 window falls in
        # the zero padding / crosses the image boundary, then store one
        # sublane-aligned (stride, L) block.  Mask is broadcast once per tap.
        for t, (dy, dx) in enumerate(taps):
            s = dy * W + dx
            if s == 0:
                blk = v
            else:
                blk = pltpu.roll(v, (-s) % L, 1) * mask_ref[t:t + 1, :]
            col_ref[t * stride:(t + 1) * stride, :] = blk

    xf = x_ref[...].astype(f32)                    # (Cx, L)
    hf = h_ref[...].astype(f32)                    # (Ch, L)

    # ---- im2col of cat[x, h] and ONE matmul for conv_zr + conv_h(x-part) ----
    pad1 = tap_pad - (Cx + Ch)
    parts = [xf, hf]
    if pad1:
        parts.append(jnp.zeros((pad1, L), f32))    # keep per-tap blocks aligned
    fill_im2col(col_xh_ref, jnp.concatenate(parts, axis=0), tap_pad)

    acc1 = dot(w1_ref[...], col_xh_ref[...])       # (3Ch, L) f32
    zr = jax.nn.sigmoid(acc1[:2 * Ch, :] + bzr_ref[...])
    z = zr[:Ch, :]
    r = zr[Ch:, :]
    hx = acc1[2 * Ch:, :]                          # x-contribution of conv_h

    # ---- im2col of r*h and the second matmul for conv_h's recurrent part ----
    rh = r * hf                                    # (Ch, L) f32
    pad2 = ch_pad - Ch
    if pad2:
        rh = jnp.concatenate([rh, jnp.zeros((pad2, L), f32)], axis=0)
    fill_im2col(col_rh_ref, rh, ch_pad)
    acc2 = dot(w2_ref[...], col_rh_ref[...])       # (Ch, L) f32

    # ---- f32 gating epilogue (lane-dense full-tile store) --------------------
    h_hat = jnp.tanh(hx + acc2 + bh_ref[...])
    out_ref[...] = ((1.0 - z) * hf + z * h_hat).astype(out_ref.dtype)


def conv_gru_pallas(x, h, w_zr, b_zr, w_h, b_h, padding, *, precision="bfloat16"):
    """ConvGRU forward.

    x: (N, Cx, H, W), h: (N, Ch, H, W) in NCHW (as the PyTorch module).
    w_zr: (2*Ch, Cx+Ch, k, k), w_h: (Ch, Cx+Ch, k, k) (OIHW), b_*: (Cout,).
    precision: "bfloat16" -> bf16 MXU products with f32 accumulation (fast),
               "highest"  -> exact f32 parity with the f32 reference.
    """
    N, Cx, H, W = x.shape
    Ch = h.shape[1]
    k = w_zr.shape[-1]
    if 2 * padding != k - 1:
        raise ValueError("ConvGRU requires 'same' convolutions "
                         "(2*padding == kernel_size - 1) so h_new matches h.")
    HW = H * W
    f32 = jnp.float32
    compute_dtype = f32 if precision == "highest" else jnp.bfloat16

    # Kernel-native layout (N, C, H*W): channels on sublanes, flattened spatial
    # on lanes.  This is a FREE reshape of NCHW -- no transpose round trips.
    x3 = x.astype(f32).reshape(N, Cx, HW)
    h3 = h.astype(f32).reshape(N, Ch, HW)

    TAP = Cx + Ch
    tap_pad = _round_up(TAP, 8)    # aligned per-tap im2col stride (sublanes)
    ch_pad = _round_up(Ch, 8)

    # im2col weight matrices: lane dim is the contraction dim (72..144 lanes),
    # so there is no 16-32x lane padding of tiny per-tap weight tiles.
    wzr = w_zr.astype(f32)
    wh = w_h.astype(f32)
    blocks1, blocks2 = [], []
    for ky in range(k):
        for kx in range(k):
            top = wzr[:, :, ky, kx]                                    # (2Ch, TAP)
            bot = jnp.concatenate([wh[:, :Cx, ky, kx],
                                   jnp.zeros((Ch, Ch), f32)], axis=1)  # (Ch, TAP)
            blk1 = jnp.concatenate([top, bot], axis=0)                 # (3Ch, TAP)
            if tap_pad > TAP:
                blk1 = jnp.concatenate(
                    [blk1, jnp.zeros((3 * Ch, tap_pad - TAP), f32)], axis=1)
            blocks1.append(blk1)
            blk2 = wh[:, Cx:, ky, kx]                                  # (Ch, Ch)
            if ch_pad > Ch:
                blk2 = jnp.concatenate(
                    [blk2, jnp.zeros((Ch, ch_pad - Ch), f32)], axis=1)
            blocks2.append(blk2)
    w1 = jnp.concatenate(blocks1, axis=1)          # (3Ch, k*k*tap_pad)
    w2 = jnp.concatenate(blocks2, axis=1)          # (Ch,  k*k*ch_pad)
    bzr = b_zr.astype(f32).reshape(2 * Ch, 1)
    bh = b_h.astype(f32).reshape(Ch, 1)

    # {0,1} per-tap in-bounds masks (host constants).  Each lane block holds
    # exactly one whole image, so the roll+mask trick never wraps across images.
    xs = np.arange(HW) % W
    ys = np.arange(HW) // W
    masks = []
    for ky in range(k):
        for kx in range(k):
            dy, dx = ky - padding, kx - padding
            ok = ((xs + dx >= 0) & (xs + dx < W) &
                  (ys + dy >= 0) & (ys + dy < H))
            masks.append(ok.astype(np.float32))
    mask_arr = jnp.asarray(np.stack(masks))        # (k*k, HW)

    kernel = functools.partial(
        convgru_kernel, k=k, pad=padding, W=W, Ch=Ch,
        tap_pad=tap_pad, ch_pad=ch_pad, compute_dtype=compute_dtype)

    full = lambda a: pl.BlockSpec(a.shape, lambda n: (0,) * a.ndim)

    out = pl.pallas_call(
        kernel,
        out_shape=jax.ShapeDtypeStruct((N, Ch, HW), f32),
        grid_spec=pltpu.PrefetchScalarGridSpec(
            num_scalar_prefetch=0,
            grid=(N,),                              # one image per grid step:
                                                    # N>=2 enables pipelining +
                                                    # v7x megacore sharding
            in_specs=[
                pl.BlockSpec((None, Cx, HW), lambda n: (n, 0, 0)),
                pl.BlockSpec((None, Ch, HW), lambda n: (n, 0, 0)),
                full(mask_arr), full(w1), full(w2), full(bzr), full(bh),
            ],
            out_specs=pl.BlockSpec((None, Ch, HW), lambda n: (n, 0, 0)),
            scratch_shapes=[
                pltpu.VMEM((k * k * tap_pad, HW), f32),   # im2col of [x; h]
                pltpu.VMEM((k * k * ch_pad, HW), f32),    # im2col of r*h
            ],
        ),
        # Batch steps are independent: "parallel" lets v7x shard them over its
        # two TensorCores; it is harmless on single-TC v5e/v6e.
        compiler_params=pltpu.CompilerParams(
            dimension_semantics=("parallel",)),
    )(x3, h3, mask_arr, w1, w2, bzr, bh)

    return out.reshape(N, Ch, H, W).astype(h.dtype)


def conv_gru_reference(x, h, w_zr, b_zr, w_h, b_h, padding):
    """Pure-JAX (XLA conv) reference matching the PyTorch forward exactly."""
    def conv(inp, w, b):
        out = lax.conv_general_dilated(
            inp, w, window_strides=(1, 1),
            padding=((padding, padding), (padding, padding)),
            dimension_numbers=('NCHW', 'OIHW', 'NCHW'),
            precision=lax.Precision.HIGHEST)
        return out + b.reshape(1, -1, 1, 1)

    Ch = h.shape[1]
    combined = jnp.concatenate([x, h], axis=1)
    zr = jax.nn.sigmoid(conv(combined, w_zr, b_zr))
    z, r = zr[:, :Ch], zr[:, Ch:]
    combined_r = jnp.concatenate([x, r * h], axis=1)
    h_hat = jnp.tanh(conv(combined_r, w_h, b_h))
    return (1.0 - z) * h + z * h_hat


if __name__ == "__main__":
    N, Cx, Ch, H, W = 2, 4, 8, 16, 16
    ksize, pad = 3, 1

    key = jax.random.PRNGKey(0)
    k1, k2, k3, k4, k5, k6 = jax.random.split(key, 6)
    fan_in = (Cx + Ch) * ksize * ksize
    s = 1.0 / (fan_in ** 0.5)
    # Deterministic synthetic parameters (shapes as in nn.Conv2d of the module).
    w_zr = jax.random.uniform(k1, (2 * Ch, Cx + Ch, ksize, ksize), jnp.float32, -s, s)
    b_zr = jax.random.uniform(k2, (2 * Ch,), jnp.float32, -s, s)
    w_h = jax.random.uniform(k3, (Ch, Cx + Ch, ksize, ksize), jnp.float32, -s, s)
    b_h = jax.random.uniform(k4, (Ch,), jnp.float32, -s, s)

    x = jax.random.normal(k5, (N, Cx, H, W), jnp.float32)
    h = jax.random.normal(k6, (N, Ch, H, W), jnp.float32)

    ref = jax.block_until_ready(conv_gru_reference(x, h, w_zr, b_zr, w_h, b_h, pad))

    # Exact-parity path (f32 MXU, Precision.HIGHEST).
    out_f32 = jax.block_until_ready(
        conv_gru_pallas(x, h, w_zr, b_zr, w_h, b_h, pad, precision="highest"))
    assert out_f32.shape == (N, Ch, H, W)
    err_f32 = float(jnp.max(jnp.abs(out_f32 - ref)))
    assert jnp.allclose(out_f32, ref, atol=1e-4, rtol=1e-4), f"f32 max_err={err_f32}"

    # Fast path: bf16 MXU products, f32 accumulation + f32 sigmoid/tanh/gating.
    out_bf16 = jax.block_until_ready(
        conv_gru_pallas(x, h, w_zr, b_zr, w_h, b_h, pad, precision="bfloat16"))
    err_bf16 = float(jnp.max(jnp.abs(out_bf16 - ref)))
    assert jnp.allclose(out_bf16, ref, atol=3e-2, rtol=3e-2), f"bf16 max_err={err_bf16}"

    print("KERNEL_OK")
</pallas_src>

<mosaic_0001>
module attributes {stable_mosaic.version = 11 : i64} {
  func.func @convgru_kernel(%arg0: i32, %arg1: memref<1x4x256xf32, #tpu.memory_space<vmem>>, %arg2: memref<1x8x256xf32, #tpu.memory_space<vmem>>, %arg3: memref<9x256xf32, #tpu.memory_space<vmem>>, %arg4: memref<24x144xf32, #tpu.memory_space<vmem>>, %arg5: memref<8x72xf32, #tpu.memory_space<vmem>>, %arg6: memref<16x1xf32, #tpu.memory_space<vmem>>, %arg7: memref<8x1xf32, #tpu.memory_space<vmem>>, %arg8: memref<1x8x256xf32, #tpu.memory_space<vmem>>, %arg9: memref<144x256xf32, #tpu.memory_space<vmem>>, %arg10: memref<72x256xf32, #tpu.memory_space<vmem>>) attributes {dimension_semantics = [#tpu.dimension_semantics<parallel>], iteration_bounds = array<i64: 2>, scalar_prefetch = 0 : i64, scratch_operands = 2 : i64, tpu.core_type = #tpu.core_type<tc>, window_params = [{transform_indices = @transform_0, window_bounds = array<i64: 1, 4, 256>}, {transform_indices = @transform_1, window_bounds = array<i64: 1, 8, 256>}, {pipeline_mode = #tpu.pipeline_mode<synchronous>, transform_indices = @transform_2, window_bounds = array<i64: 9, 256>}, {pipeline_mode = #tpu.pipeline_mode<synchronous>, transform_indices = @transform_3, window_bounds = array<i64: 24, 144>}, {pipeline_mode = #tpu.pipeline_mode<synchronous>, transform_indices = @transform_4, window_bounds = array<i64: 8, 72>}, {pipeline_mode = #tpu.pipeline_mode<synchronous>, transform_indices = @transform_5, window_bounds = array<i64: 16, 1>}, {pipeline_mode = #tpu.pipeline_mode<synchronous>, transform_indices = @transform_6, window_bounds = array<i64: 8, 1>}, {transform_indices = @transform_7, window_bounds = array<i64: 1, 8, 256>}]} {
    %c0 = arith.constant 0 : index
    %c0_0 = arith.constant 0 : index
    %c0_1 = arith.constant 0 : index
    %0 = vector.load %arg1[%c0, %c0_0, %c0_1] : memref<1x4x256xf32, #tpu.memory_space<vmem>>, vector<1x4x256xf32>
    %1 = vector.shape_cast %0 : vector<1x4x256xf32> to vector<4x256xf32>
    %c0_2 = arith.constant 0 : index
    %c0_3 = arith.constant 0 : index
    %c0_4 = arith.constant 0 : index
    %2 = vector.load %arg2[%c0_2, %c0_3, %c0_4] : memref<1x8x256xf32, #tpu.memory_space<vmem>>, vector<1x8x256xf32>
    %3 = vector.shape_cast %2 : vector<1x8x256xf32> to vector<8x256xf32>
    %cst = arith.constant 0.000000e+00 : f32
    %4 = vector.broadcast %cst : f32 to vector<4x256xf32>
    %5 = tpu.concatenate %1, %3, %4 in 0 : vector<4x256xf32>, vector<8x256xf32>, vector<4x256xf32> -> vector<16x256xf32>
    %c17_i32 = arith.constant 17 : i32
    %6 = tpu.dynamic_rotate %5 by %c17_i32 dim 1 : vector<16x256xf32>, i32 -> vector<16x256xf32>
    %c0_5 = arith.constant 0 : index
    %c0_6 = arith.constant 0 : index
    %7 = vector.load %arg3[%c0_5, %c0_6] : memref<9x256xf32, #tpu.memory_space<vmem>>, vector<1x256xf32>
    %8 = vector.broadcast %7 : vector<1x256xf32> to vector<16x256xf32>
    %9 = arith.mulf %6, %8 : vector<16x256xf32>
    %c0_7 = arith.constant 0 : index
    %c0_8 = arith.constant 0 : index
    %10 = vector.load %arg9[%c0_7, %c0_8] : memref<144x256xf32, #tpu.memory_space<vmem>>, vector<16x256xf32>
    tpu.vector_store %arg9[%c0_7, %c0_8], %9 {strides = array<i32>} : memref<144x256xf32, #tpu.memory_space<vmem>>, vector<16x256xf32>,
    %c16_i32 = arith.constant 16 : i32
    %11 = tpu.dynamic_rotate %5 by %c16_i32 dim 1 : vector<16x256xf32>, i32 -> vector<16x256xf32>
    %c1 = arith.constant 1 : index
    %c0_9 = arith.constant 0 : index
    %12 = vector.load %arg3[%c1, %c0_9] : memref<9x256xf32, #tpu.memory_space<vmem>>, vector<1x256xf32>
    %13 = vector.broadcast %12 : vector<1x256xf32> to vector<16x256xf32>
    %14 = arith.mulf %11, %13 : vector<16x256xf32>
    %c16 = arith.constant 16 : index
    %c0_10 = arith.constant 0 : index
    %15 = vector.load %arg9[%c16, %c0_10] : memref<144x256xf32, #tpu.memory_space<vmem>>, vector<16x256xf32>
    tpu.vector_store %arg9[%c16, %c0_10], %14 {strides = array<i32>} : memref<144x256xf32, #tpu.memory_space<vmem>>, vector<16x256xf32>,
    %c15_i32 = arith.constant 15 : i32
    %16 = tpu.dynamic_rotate %5 by %c15_i32 dim 1 : vector<16x256xf32>, i32 -> vector<16x256xf32>
    %c2 = arith.constant 2 : index
    %c0_11 = arith.constant 0 : index
    %17 = vector.load %arg3[%c2, %c0_11] : memref<9x256xf32, #tpu.memory_space<vmem>>, vector<1x256xf32>
    %18 = vector.broadcast %17 : vector<1x256xf32> to vector<16x256xf32>
    %19 = arith.mulf %16, %18 : vector<16x256xf32>
    %c32 = arith.constant 32 : index
    %c0_12 = arith.constant 0 : index
    %20 = vector.load %arg9[%c32, %c0_12] : memref<144x256xf32, #tpu.memory_space<vmem>>, vector<16x256xf32>
    tpu.vector_store %arg9[%c32, %c0_12], %19 {strides = array<i32>} : memref<144x256xf32, #tpu.memory_space<vmem>>, vector<16x256xf32>,
    %c1_i32 = arith.constant 1 : i32
    %21 = tpu.dynamic_rotate %5 by %c1_i32 dim 1 : vector<16x256xf32>, i32 -> vector<16x256xf32>
    %c3 = arith.constant 3 : index
    %c0_13 = arith.constant 0 : index
    %22 = vector.load %arg3[%c3, %c0_13] : memref<9x256xf32, #tpu.memory_space<vmem>>, vector<1x256xf32>
    %23 = vector.broadcast %22 : vector<1x256xf32> to vector<16x256xf32>
    %24 = arith.mulf %21, %23 : vector<16x256xf32>
    %c48 = arith.constant 48 : index
    %c0_14 = arith.constant 0 : index
    %25 = vector.load %arg9[%c48, %c0_14] : memref<144x256xf32, #tpu.memory_space<vmem>>, vector<16x256xf32>
    tpu.vector_store %arg9[%c48, %c0_14], %24 {strides = array<i32>} : memref<144x256xf32, #tpu.memory_space<vmem>>, vector<16x256xf32>,
    %c64 = arith.constant 64 : index
    %c0_15 = arith.constant 0 : index
    %26 = vector.load %arg9[%c64, %c0_15] : memref<144x256xf32, #tpu.memory_space<vmem>>, vector<16x256xf32>
    tpu.vector_store %arg9[%c64, %c0_15], %5 {strides = array<i32>} : memref<144x256xf32, #tpu.memory_space<vmem>>, vector<16x256xf32>,
    %c255_i32 = arith.constant 255 : i32
    %27 = tpu.dynamic_rotate %5 by %c255_i32 dim 1 : vector<16x256xf32>, i32 -> vector<16x256xf32>
    %c5 = arith.constant 5 : index
    %c0_16 = arith.constant 0 : index
    %28 = vector.load %arg3[%c5, %c0_16] : memref<9x256xf32, #tpu.memory_space<vmem>>, vector<1x256xf32>
    %29 = vector.broadcast %28 : vector<1x256xf32> to vector<16x256xf32>
    %30 = arith.mulf %27, %29 : vector<16x256xf32>
    %c80 = arith.constant 80 : index
    %c0_17 = arith.constant 0 : index
    %31 = vector.load %arg9[%c80, %c0_17] : memref<144x256xf32, #tpu.memory_space<vmem>>, vector<16x256xf32>
    tpu.vector_store %arg9[%c80, %c0_17], %30 {strides = array<i32>} : memref<144x256xf32, #tpu.memory_space<vmem>>, vector<16x256xf32>,
    %c241_i32 = arith.constant 241 : i32
    %32 = tpu.dynamic_rotate %5 by %c241_i32 dim 1 : vector<16x256xf32>, i32 -> vector<16x256xf32>
    %c6 = arith.constant 6 : index
    %c0_18 = arith.constant 0 : index
    %33 = vector.load %arg3[%c6, %c0_18] : memref<9x256xf32, #tpu.memory_space<vmem>>, vector<1x256xf32>
    %34 = vector.broadcast %33 : vector<1x256xf32> to vector<16x256xf32>
    %35 = arith.mulf %32, %34 : vector<16x256xf32>
    %c96 = arith.constant 96 : index
    %c0_19 = arith.constant 0 : index
    %36 = vector.load %arg9[%c96, %c0_19] : memref<144x256xf32, #tpu.memory_space<vmem>>, vector<16x256xf32>
    tpu.vector_store %arg9[%c96, %c0_19], %35 {strides = array<i32>} : memref<144x256xf32, #tpu.memory_space<vmem>>, vector<16x256xf32>,
    %c240_i32 = arith.constant 240 : i32
    %37 = tpu.dynamic_rotate %5 by %c240_i32 dim 1 : vector<16x256xf32>, i32 -> vector<16x256xf32>
    %c7 = arith.constant 7 : index
    %c0_20 = arith.constant 0 : index
    %38 = vector.load %arg3[%c7, %c0_20] : memref<9x256xf32, #tpu.memory_space<vmem>>, vector<1x256xf32>
    %39 = vector.broadcast %38 : vector<1x256xf32> to vector<16x256xf32>
    %40 = arith.mulf %37, %39 : vector<16x256xf32>
    %c112 = arith.constant 112 : index
    %c0_21 = arith.constant 0 : index
    %41 = vector.load %arg9[%c112, %c0_21] : memref<144x256xf32, #tpu.memory_space<vmem>>, vector<16x256xf32>
    tpu.vector_store %arg9[%c112, %c0_21], %40 {strides = array<i32>} : memref<144x256xf32, #tpu.memory_space<vmem>>, vector<16x256xf32>,
    %c239_i32 = arith.constant 239 : i32
    %42 = tpu.dynamic_rotate %5 by %c239_i32 dim 1 : vector<16x256xf32>, i32 -> vector<16x256xf32>
    %c8 = arith.constant 8 : index
    %c0_22 = arith.constant 0 : index
    %43 = vector.load %arg3[%c8, %c0_22] : memref<9x256xf32, #tpu.memory_space<vmem>>, vector<1x256xf32>
    %44 = vector.broadcast %43 : vector<1x256xf32> to vector<16x256xf32>
    %45 = arith.mulf %42, %44 : vector<16x256xf32>
    %c128 = arith.constant 128 : index
    %c0_23 = arith.constant 0 : index
    %46 = vector.load %arg9[%c128, %c0_23] : memref<144x256xf32, #tpu.memory_space<vmem>>, vector<16x256xf32>
    tpu.vector_store %arg9[%c128, %c0_23], %45 {strides = array<i32>} : memref<144x256xf32, #tpu.memory_space<vmem>>, vector<16x256xf32>,
    %c0_24 = arith.constant 0 : index
    %c0_25 = arith.constant 0 : index
    %47 = vector.load %arg4[%c0_24, %c0_25] : memref<24x144xf32, #tpu.memory_space<vmem>>, vector<24x144xf32>
    %c0_26 = arith.constant 0 : index
    %c0_27 = arith.constant 0 : index
    %48 = vector.load %arg9[%c0_26, %c0_27] : memref<144x256xf32, #tpu.memory_space<vmem>>, vector<144x256xf32>
    %cst_28 = arith.constant dense<0.000000e+00> : vector<24x256xf32>
    %49 = tpu.matmul %47, %48, %cst_28 {dimension_numbers = #tpu.dot_dimension_numbers<[1], [0], [0], [1], [0, 0, 1, 1], [], []>, precision = #tpu.contract_precision<fp32>} : vector<24x144xf32>, vector<144x256xf32>, vector<24x256xf32> -> vector<24x256xf32>
    %50 = vector.extract_strided_slice %49 {offsets = [0, 0], sizes = [16, 256], strides = [1, 1]} : vector<24x256xf32> to vector<16x256xf32>
    %c0_29 = arith.constant 0 : index
    %c0_30 = arith.constant 0 : index
    %51 = vector.load %arg6[%c0_29, %c0_30] : memref<16x1xf32, #tpu.memory_space<vmem>>, vector<16x1xf32>
    %52 = vector.broadcast %51 : vector<16x1xf32> to vector<16x256xf32>
    %53 = arith.addf %50, %52 : vector<16x256xf32>
    %54 = arith.negf %53 : vector<16x256xf32>
    %55 = math.exp %54 : vector<16x256xf32>
    %cst_31 = arith.constant 1.000000e+00 : f32
    %56 = vector.broadcast %cst_31 : f32 to vector<16x256xf32>
    %57 = arith.addf %56, %55 : vector<16x256xf32>
    %58 = arith.divf %56, %57 : vector<16x256xf32>
    %59 = vector.extract_strided_slice %58 {offsets = [0, 0], sizes = [8, 256], strides = [1, 1]} : vector<16x256xf32> to vector<8x256xf32>
    %60 = vector.extract_strided_slice %58 {offsets = [8, 0], sizes = [8, 256], strides = [1, 1]} : vector<16x256xf32> to vector<8x256xf32>
    %61 = vector.extract_strided_slice %49 {offsets = [16, 0], sizes = [8, 256], strides = [1, 1]} : vector<24x256xf32> to vector<8x256xf32>
    %62 = arith.mulf %60, %3 : vector<8x256xf32>
    %c17_i32_32 = arith.constant 17 : i32
    %63 = tpu.dynamic_rotate %62 by %c17_i32_32 dim 1 : vector<8x256xf32>, i32 -> vector<8x256xf32>
    %c0_33 = arith.constant 0 : index
    %c0_34 = arith.constant 0 : index
    %64 = vector.load %arg3[%c0_33, %c0_34] : memref<9x256xf32, #tpu.memory_space<vmem>>, vector<1x256xf32>
    %65 = vector.broadcast %64 : vector<1x256xf32> to vector<8x256xf32>
    %66 = arith.mulf %63, %65 : vector<8x256xf32>
    %c0_35 = arith.constant 0 : index
    %c0_36 = arith.constant 0 : index
    %67 = vector.load %arg10[%c0_35, %c0_36] : memref<72x256xf32, #tpu.memory_space<vmem>>, vector<8x256xf32>
    tpu.vector_store %arg10[%c0_35, %c0_36], %66 {strides = array<i32>} : memref<72x256xf32, #tpu.memory_space<vmem>>, vector<8x256xf32>,
    %c16_i32_37 = arith.constant 16 : i32
    %68 = tpu.dynamic_rotate %62 by %c16_i32_37 dim 1 : vector<8x256xf32>, i32 -> vector<8x256xf32>
    %c1_38 = arith.constant 1 : index
    %c0_39 = arith.constant 0 : index
    %69 = vector.load %arg3[%c1_38, %c0_39] : memref<9x256xf32, #tpu.memory_space<vmem>>, vector<1x256xf32>
    %70 = vector.broadcast %69 : vector<1x256xf32> to vector<8x256xf32>
    %71 = arith.mulf %68, %70 : vector<8x256xf32>
    %c8_40 = arith.constant 8 : index
    %c0_41 = arith.constant 0 : index
    %72 = vector.load %arg10[%c8_40, %c0_41] : memref<72x256xf32, #tpu.memory_space<vmem>>, vector<8x256xf32>
    tpu.vector_store %arg10[%c8_40, %c0_41], %71 {strides = array<i32>} : memref<72x256xf32, #tpu.memory_space<vmem>>, vector<8x256xf32>,
    %c15_i32_42 = arith.constant 15 : i32
    %73 = tpu.dynamic_rotate %62 by %c15_i32_42 dim 1 : vector<8x256xf32>, i32 -> vector<8x256xf32>
    %c2_43 = arith.constant 2 : index
    %c0_44 = arith.constant 0 : index
    %74 = vector.load %arg3[%c2_43, %c0_44] : memref<9x256xf32, #tpu.memory_space<vmem>>, vector<1x256xf32>
    %75 = vector.broadcast %74 : vector<1x256xf32> to vector<8x256xf32>
    %76 = arith.mulf %73, %75 : vector<8x256xf32>
    %c16_45 = arith.constant 16 : index
    %c0_46 = arith.constant 0 : index
    %77 = vector.load %arg10[%c16_45, %c0_46] : memref<72x256xf32, #tpu.memory_space<vmem>>, vector<8x256xf32>
    tpu.vector_store %arg10[%c16_45, %c0_46], %76 {strides = array<i32>} : memref<72x256xf32, #tpu.memory_space<vmem>>, vector<8x256xf32>,
    %c1_i32_47 = arith.constant 1 : i32
    %78 = tpu.dynamic_rotate %62 by %c1_i32_47 dim 1 : vector<8x256xf32>, i32 -> vector<8x256xf32>
    %c3_48 = arith.constant 3 : index
    %c0_49 = arith.constant 0 : index
    %79 = vector.load %arg3[%c3_48, %c0_49] : memref<9x256xf32, #tpu.memory_space<vmem>>, vector<1x256xf32>
    %80 = vector.broadcast %79 : vector<1x256xf32> to vector<8x256xf32>
    %81 = arith.mulf %78, %80 : vector<8x256xf32>
    %c24 = arith.constant 24 : index
    %c0_50 = arith.constant 0 : index
    %82 = vector.load %arg10[%c24, %c0_50] : memref<72x256xf32, #tpu.memory_space<vmem>>, vector<8x256xf32>
    tpu.vector_store %arg10[%c24, %c0_50], %81 {strides = array<i32>} : memref<72x256xf32, #tpu.memory_space<vmem>>, vector<8x256xf32>,
    %c32_51 = arith.constant 32 : index
    %c0_52 = arith.constant 0 : index
    %83 = vector.load %arg10[%c32_51, %c0_52] : memref<72x256xf32, #tpu.memory_space<vmem>>, vector<8x256xf32>
    tpu.vector_store %arg10[%c32_51, %c0_52], %62 {strides = array<i32>} : memref<72x256xf32, #tpu.memory_space<vmem>>, vector<8x256xf32>,
    %c255_i32_53 = arith.constant 255 : i32
    %84 = tpu.dynamic_rotate %62 by %c255_i32_53 dim 1 : vector<8x256xf32>, i32 -> vector<8x256xf32>
    %c5_54 = arith.constant 5 : index
    %c0_55 = arith.constant 0 : index
    %85 = vector.load %arg3[%c5_54, %c0_55] : memref<9x256xf32, #tpu.memory_space<vmem>>, vector<1x256xf32>
    %86 = vector.broadcast %85 : vector<1x256xf32> to vector<8x256xf32>
    %87 = arith.mulf %84, %86 : vector<8x256xf32>
    %c40 = arith.constant 40 : index
    %c0_56 = arith.constant 0 : index
    %88 = vector.load %arg10[%c40, %c0_56] : memref<72x256xf32, #tpu.memory_space<vmem>>, vector<8x256xf32>
    tpu.vector_store %arg10[%c40, %c0_56], %87 {strides = array<i32>} : memref<72x256xf32, #tpu.memory_space<vmem>>, vector<8x256xf32>,
    %c241_i32_57 = arith.constant 241 : i32
    %89 = tpu.dynamic_rotate %62 by %c241_i32_57 dim 1 : vector<8x256xf32>, i32 -> vector<8x256xf32>
    %c6_58 = arith.constant 6 : index
    %c0_59 = arith.constant 0 : index
    %90 = vector.load %arg3[%c6_58, %c0_59] : memref<9x256xf32, #tpu.memory_space<vmem>>, vector<1x256xf32>
    %91 = vector.broadcast %90 : vector<1x256xf32> to vector<8x256xf32>
    %92 = arith.mulf %89, %91 : vector<8x256xf32>
    %c48_60 = arith.constant 48 : index
    %c0_61 = arith.constant 0 : index
    %93 = vector.load %arg10[%c48_60, %c0_61] : memref<72x256xf32, #tpu.memory_space<vmem>>, vector<8x256xf32>
    tpu.vector_store %arg10[%c48_60, %c0_61], %92 {strides = array<i32>} : memref<72x256xf32, #tpu.memory_space<vmem>>, vector<8x256xf32>,
    %c240_i32_62 = arith.constant 240 : i32
    %94 = tpu.dynamic_rotate %62 by %c240_i32_62 dim 1 : vector<8x256xf32>, i32 -> vector<8x256xf32>
    %c7_63 = arith.constant 7 : index
    %c0_64 = arith.constant 0 : index
    %95 = vector.load %arg3[%c7_63, %c0_64] : memref<9x256xf32, #tpu.memory_space<vmem>>, vector<1x256xf32>
    %96 = vector.broadcast %95 : vector<1x256xf32> to vector<8x256xf32>
    %97 = arith.mulf %94, %96 : vector<8x256xf32>
    %c56 = arith.constant 56 : index
    %c0_65 = arith.constant 0 : index
    %98 = vector.load %arg10[%c56, %c0_65] : memref<72x256xf32, #tpu.memory_space<vmem>>, vector<8x256xf32>
    tpu.vector_store %arg10[%c56, %c0_65], %97 {strides = array<i32>} : memref<72x256xf32, #tpu.memory_space<vmem>>, vector<8x256xf32>,
    %c239_i32_66 = arith.constant 239 : i32
    %99 = tpu.dynamic_rotate %62 by %c239_i32_66 dim 1 : vector<8x256xf32>, i32 -> vector<8x256xf32>
    %c8_67 = arith.constant 8 : index
    %c0_68 = arith.constant 0 : index
    %100 = vector.load %arg3[%c8_67, %c0_68] : memref<9x256xf32, #tpu.memory_space<vmem>>, vector<1x256xf32>
    %101 = vector.broadcast %100 : vector<1x256xf32> to vector<8x256xf32>
    %102 = arith.mulf %99, %101 : vector<8x256xf32>
    %c64_69 = arith.constant 64 : index
    %c0_70 = arith.constant 0 : index
    %103 = vector.load %arg10[%c64_69, %c0_70] : memref<72x256xf32, #tpu.memory_space<vmem>>, vector<8x256xf32>
    tpu.vector_store %arg10[%c64_69, %c0_70], %102 {strides = array<i32>} : memref<72x256xf32, #tpu.memory_space<vmem>>, vector<8x256xf32>,
    %c0_71 = arith.constant 0 : index
    %c0_72 = arith.constant 0 : index
    %104 = vector.load %arg5[%c0_71, %c0_72] : memref<8x72xf32, #tpu.memory_space<vmem>>, vector<8x72xf32>
    %c0_73 = arith.constant 0 : index
    %c0_74 = arith.constant 0 : index
    %105 = vector.load %arg10[%c0_73, %c0_74] : memref<72x256xf32, #tpu.memory_space<vmem>>, vector<72x256xf32>
    %cst_75 = arith.constant dense<0.000000e+00> : vector<8x256xf32>
    %106 = tpu.matmul %104, %105, %cst_75 {dimension_numbers = #tpu.dot_dimension_numbers<[1], [0], [0], [1], [0, 0, 1, 1], [], []>, precision = #tpu.contract_precision<fp32>} : vector<8x72xf32>, vector<72x256xf32>, vector<8x256xf32> -> vector<8x256xf32>
    %107 = arith.addf %61, %106 : vector<8x256xf32>
    %c0_76 = arith.constant 0 : index
    %c0_77 = arith.constant 0 : index
    %108 = vector.load %arg7[%c0_76, %c0_77] : memref<8x1xf32, #tpu.memory_space<vmem>>, vector<8x1xf32>
    %109 = vector.broadcast %108 : vector<8x1xf32> to vector<8x256xf32>
    %110 = arith.addf %107, %109 : vector<8x256xf32>
    %111 = math.tanh %110 : vector<8x256xf32>
    %cst_78 = arith.constant 1.000000e+00 : f32
    %112 = vector.broadcast %cst_78 : f32 to vector<8x256xf32>
    %113 = arith.subf %112, %59 : vector<8x256xf32>
    %114 = arith.mulf %113, %3 : vector<8x256xf32>
    %115 = arith.mulf %59, %111 : vector<8x256xf32>
    %116 = arith.addf %114, %115 : vector<8x256xf32>
    %c0_79 = arith.constant 0 : index
    %c0_80 = arith.constant 0 : index
    %c0_81 = arith.constant 0 : index
    %117 = vector.load %arg8[%c0_79, %c0_80, %c0_81] : memref<1x8x256xf32, #tpu.memory_space<vmem>>, vector<1x8x256xf32>
    %118 = vector.shape_cast %117 : vector<1x8x256xf32> to vector<8x256xf32>
    %119 = vector.shape_cast %116 : vector<8x256xf32> to vector<1x8x256xf32>
    tpu.vector_store %arg8[%c0_79, %c0_80, %c0_81], %119 {strides = array<i32>} : memref<1x8x256xf32, #tpu.memory_space<vmem>>, vector<1x8x256xf32>,
    return
  }
  func.func @transform_0(%arg0: i32) -> (i32, i32, i32) {
    %c0_i32 = arith.constant 0 : i32
    %c0_i32_0 = arith.constant 0 : i32
    %c0_i32_1 = arith.constant 0 : i32
    return %arg0, %c0_i32, %c0_i32_0 : i32, i32, i32
  }
  func.func @transform_1(%arg0: i32) -> (i32, i32, i32) {
    %c0_i32 = arith.constant 0 : i32
    %c0_i32_0 = arith.constant 0 : i32
    %c0_i32_1 = arith.constant 0 : i32
    return %arg0, %c0_i32, %c0_i32_0 : i32, i32, i32
  }
  func.func @transform_2(%arg0: i32) -> (i32, i32) {
    %c0_i32 = arith.constant 0 : i32
    %c0_i32_0 = arith.constant 0 : i32
    %c0_i32_1 = arith.constant 0 : i32
    return %c0_i32, %c0_i32_0 : i32, i32
  }
  func.func @transform_3(%arg0: i32) -> (i32, i32) {
    %c0_i32 = arith.constant 0 : i32
    %c0_i32_0 = arith.constant 0 : i32
    %c0_i32_1 = arith.constant 0 : i32
    return %c0_i32, %c0_i32_0 : i32, i32
  }
  func.func @transform_4(%arg0: i32) -> (i32, i32) {
    %c0_i32 = arith.constant 0 : i32
    %c0_i32_0 = arith.constant 0 : i32
    %c0_i32_1 = arith.constant 0 : i32
    return %c0_i32, %c0_i32_0 : i32, i32
  }
  func.func @transform_5(%arg0: i32) -> (i32, i32) {
    %c0_i32 = arith.constant 0 : i32
    %c0_i32_0 = arith.constant 0 : i32
    %c0_i32_1 = arith.constant 0 : i32
    return %c0_i32, %c0_i32_0 : i32, i32
  }
  func.func @transform_6(%arg0: i32) -> (i32, i32) {
    %c0_i32 = arith.constant 0 : i32
    %c0_i32_0 = arith.constant 0 : i32
    %c0_i32_1 = arith.constant 0 : i32
    return %c0_i32, %c0_i32_0 : i32, i32
  }
  func.func @transform_7(%arg0: i32) -> (i32, i32, i32) {
    %c0_i32 = arith.constant 0 : i32
    %c0_i32_0 = arith.constant 0 : i32
    %c0_i32_1 = arith.constant 0 : i32
    return %arg0, %c0_i32, %c0_i32_0 : i32, i32, i32
  }
}

</mosaic_0001>

<llo_original>
// kernel: tpu_custom_call.1
$region0: #{tpu_custom_call.1}
  #allocation0 [shape = 'u32[]', space=smem, size = 0x4, offset = 0x4, fixed_abs, tag = 'smem constant byte address 0x4 - core index']
  #allocation1 [shape = 'u32[144,128]{1,0:T(1,128)}', space=vmem, size = 0x12000, scoped, tag = 'internal scratch']
  #allocation2 [shape = 'f32[144,256]{1,0:T(8,128)}', space=vmem, size = 0x24000, scoped, tag = 'scratch operand']
  #allocation3 [shape = 'f32[72,256]{1,0:T(8,128)}', space=vmem, size = 0x12000, scoped, tag = 'scratch operand']
  %s0 = inlined_call_operand.hbm [shape: f32[2,4,256], index: 0, kind: input, shape index: {}]
  %s1 = inlined_call_operand.hbm [shape: f32[2,8,256], index: 1, kind: input, shape index: {}]
  %s2 = inlined_call_operand.vmem [shape: f32[9,256], index: 2, kind: input, shape index: {}]
  %s3 = inlined_call_operand.hbm [shape: f32[24,144], index: 3, kind: input, shape index: {}]
  %s4 = inlined_call_operand.vmem [shape: f32[8,72], index: 4, kind: input, shape index: {}]
  %s5 = inlined_call_operand.vmem [shape: f32[16,1], index: 5, kind: input, shape index: {}]
  %s6 = inlined_call_operand.vmem [shape: f32[8,1], index: 6, kind: input, shape index: {}]
  %s7 = inlined_call_operand.hbm [shape: f32[2,8,256], index: 7, kind: output, shape index: {}]
  %s8 = sld [smem:[#allocation0]]
  $region73: #{tpu_custom_call.1} parent=0
    _
  %s10 = ssub.s32 1, %s8
  %s11 = scalar_select 0, %s10, %s8
  $region1: #{tpu_custom_call.1} parent=0
    #allocation4 [shape = 'u8[8192]{0}', space=vmem, size = 0x2000, scoped, tag = 'input window, operand 0']
    #allocation5 [shape = 's32[2]{0}', space=sflag, size = 0x8, scoped, tag = 'scoped memory for tpu_custom_call.1']
    #allocation6 [shape = 's32[2]{0}', space=sflag, size = 0x8, scoped, tag = 'scoped memory for tpu_custom_call.1']
    #allocation7 [shape = 'u8[16384]{0}', space=vmem, size = 0x4000, scoped, tag = 'input window, operand 1']
    #allocation8 [shape = 's32[2]{0}', space=sflag, size = 0x8, scoped, tag = 'scoped memory for tpu_custom_call.1']
    #allocation9 [shape = 'u8[24576]{0}', space=vmem, size = 0x6000, scoped, tag = 'input window, operand 3, single buffered']
    #allocation10 [shape = 'u8[16384]{0}', space=vmem, size = 0x4000, scoped, tag = 'output window, operand 0']
    %12 = vsyncpa [#allocation5], 0
    %s13 = scalar_lea.sflag [#allocation5], 1
    %14 = vsyncpa %s13, 0
    %15 = vsyncpa [#allocation8], 0
    %s16 = scalar_lea.sflag [#allocation8], 1
    %17 = vsyncpa %s16, 0
    %18 = vsyncpa [#allocation6], 0
    %s19 = scalar_lea.sflag [#allocation6], 1
    %20 = vsyncpa %s19, 0
    loop: start=0, step=1, limit=4
    $region2: #{tpu_custom_call.1} parent=1 // loop_pre_header
      _
    $region3: #{tpu_custom_call.1} parent=1 // loop_header
      %s22 = sphi 0, %s26
      %p23 = scmp.ge.s32.totalorder %s22, 4
      %s32 = sphi 0, %s34
      %s35 = sphi 0, %s32
      %s36 = sphi 0, %s35
      %s52 = sphi 0, %s36
      %s58 = sphi 0, %s60
      %s61 = sphi 0, %s58
      %s62 = sphi 0, %s61
      %s78 = sphi 0, %s62
      %s82 = sphi 0, %s82
      %s84 = sphi 0, %s82
      %s85 = sphi 0, %s84
      %s99 = sphi 0, %s85
      %s103 = sphi 0, %s103
      %s105 = sphi 0, %s103
      %s106 = sphi 0, %s105
      %s120 = sphi 0, %s106
      %s124 = sphi 0, %s124
      %s126 = sphi 0, %s124
      %s127 = sphi 0, %s126
      %s141 = sphi 0, %s127
      %s145 = sphi 0, %s145
      %s147 = sphi 0, %s145
      %s148 = sphi 0, %s147
      %s162 = sphi 0, %s148
      %s166 = sphi 0, %s166
      %s168 = sphi 0, %s166
      %s169 = sphi 0, %s168
      %s183 = sphi 0, %s169
      %s189 = sphi 0, %s191
      %s192 = sphi 0, %s189
      %s193 = sphi 0, %s192
      %s209 = sphi 0, %s193
    $region4: #{tpu_custom_call.1} parent=1 // loop_header_branch
      %25 = sbr.rel (%p23) target = $region8
    $region5: #{tpu_custom_call.1} parent=1 // loop_body
      %s27 = ssub.s32 %s22, 1
      %s28 = ssub.s32 %s22, 2
      %s29 = sadd.s32 %s22, 1
      %s30 = ssub.s32 %s22, %s29
      %p31 = scmp.eq.s32.totalorder %s30, 0
      %s33 = sadd.s32 %s32, 1
      %s34 = scalar_select %p31, %s32, %s33
      %p37 = pneg %p31
      %p38 = scmp.eq.s32.totalorder %s22, 1
      %p39 = por %p37, %p38
      %p40 = scmp.ne.s32.totalorder %s32, %s35
      %p41 = scmp.eq.s32.totalorder %s22, 0
      %p42 = por %p40, %p41
      %p43 = scmp.ne.s32.totalorder %s32, %s35
      %p44 = scmp.eq.s32.totalorder %s27, 1
      %p45 = por %p43, %p44
      %p46 = scmp.ne.s32.totalorder %s35, %s36
      %p47 = scmp.eq.s32.totalorder %s27, 0
      %p48 = por %p46, %p47
      %p49 = scmp.ne.s32.totalorder %s35, %s36
      %p50 = scmp.eq.s32.totalorder %s28, 1
      %p51 = por %p49, %p50
      %p53 = scmp.ne.s32.totalorder %s36, %s52
      %p54 = scmp.eq.s32.totalorder %s28, 0
      %p55 = por %p53, %p54
      %s56 = ssub.s32 %s22, %s29
      %p57 = scmp.eq.s32.totalorder %s56, 0
      %s59 = sadd.s32 %s58, 1
      %s60 = scalar_select %p57, %s58, %s59
      %p63 = pneg %p57
      %p64 = scmp.eq.s32.totalorder %s22, 1
      %p65 = por %p63, %p64
      %p66 = scmp.ne.s32.totalorder %s58, %s61
      %p67 = scmp.eq.s32.totalorder %s22, 0
      %p68 = por %p66, %p67
      %p69 = scmp.ne.s32.totalorder %s58, %s61
      %p70 = scmp.eq.s32.totalorder %s27, 1
      %p71 = por %p69, %p70
      %p72 = scmp.ne.s32.totalorder %s61, %s62
      %p73 = scmp.eq.s32.totalorder %s27, 0
      %p74 = por %p72, %p73
      %p75 = scmp.ne.s32.totalorder %s61, %s62
      %p76 = scmp.eq.s32.totalorder %s28, 1
      %p77 = por %p75, %p76
      %p79 = scmp.ne.s32.totalorder %s62, %s78
      %p80 = scmp.eq.s32.totalorder %s28, 0
      %p81 = por %p79, %p80
      %s83 = sadd.s32 %s82, 1
      %p86 = scmp.eq.s32.totalorder %s22, 1
      %p87 = scmp.ne.s32.totalorder %s82, %s84
      %p88 = scmp.eq.s32.totalorder %s22, 0
      %p89 = por %p87, %p88
      %p90 = scmp.ne.s32.totalorder %s82, %s84
      %p91 = scmp.eq.s32.totalorder %s27, 1
      %p92 = por %p90, %p91
      %p93 = scmp.ne.s32.totalorder %s84, %s85
      %p94 = scmp.eq.s32.totalorder %s27, 0
      %p95 = por %p93, %p94
      %p96 = scmp.ne.s32.totalorder %s84, %s85
      %p97 = scmp.eq.s32.totalorder %s28, 1
      %p98 = por %p96, %p97
      %p100 = scmp.ne.s32.totalorder %s85, %s99
      %p101 = scmp.eq.s32.totalorder %s28, 0
      %p102 = por %p100, %p101
      %s104 = sadd.s32 %s103, 1
      %p107 = scmp.eq.s32.totalorder %s22, 1
      %p108 = scmp.ne.s32.totalorder %s103, %s105
      %p109 = scmp.eq.s32.totalorder %s22, 0
      %p110 = por %p108, %p109
      %p111 = scmp.ne.s32.totalorder %s103, %s105
      %p112 = scmp.eq.s32.totalorder %s27, 1
      %p113 = por %p111, %p112
      %p114 = scmp.ne.s32.totalorder %s105, %s106
      %p115 = scmp.eq.s32.totalorder %s27, 0
      %p116 = por %p114, %p115
      %p117 = scmp.ne.s32.totalorder %s105, %s106
      %p118 = scmp.eq.s32.totalorder %s28, 1
      %p119 = por %p117, %p118
      %p121 = scmp.ne.s32.totalorder %s106, %s120
      %p122 = scmp.eq.s32.totalorder %s28, 0
      %p123 = por %p121, %p122
      %s125 = sadd.s32 %s124, 1
      %p128 = scmp.eq.s32.totalorder %s22, 1
      %p129 = scmp.ne.s32.totalorder %s124, %s126
      %p130 = scmp.eq.s32.totalorder %s22, 0
      %p131 = por %p129, %p130
      %p132 = scmp.ne.s32.totalorder %s124, %s126
      %p133 = scmp.eq.s32.totalorder %s27, 1
      %p134 = por %p132, %p133
      %p135 = scmp.ne.s32.totalorder %s126, %s127
      %p136 = scmp.eq.s32.totalorder %s27, 0
      %p137 = por %p135, %p136
      %p138 = scmp.ne.s32.totalorder %s126, %s127
      %p139 = scmp.eq.s32.totalorder %s28, 1
      %p140 = por %p138, %p139
      %p142 = scmp.ne.s32.totalorder %s127, %s141
      %p143 = scmp.eq.s32.totalorder %s28, 0
      %p144 = por %p142, %p143
      %s146 = sadd.s32 %s145, 1
      %p149 = scmp.eq.s32.totalorder %s22, 1
      %p150 = scmp.ne.s32.totalorder %s145, %s147
      %p151 = scmp.eq.s32.totalorder %s22, 0
      %p152 = por %p150, %p151
      %p153 = scmp.ne.s32.totalorder %s145, %s147
      %p154 = scmp.eq.s32.totalorder %s27, 1
      %p155 = por %p153, %p154
      %p156 = scmp.ne.s32.totalorder %s147, %s148
      %p157 = scmp.eq.s32.totalorder %s27, 0
      %p158 = por %p156, %p157
      %p159 = scmp.ne.s32.totalorder %s147, %s148
      %p160 = scmp.eq.s32.totalorder %s28, 1
      %p161 = por %p159, %p160
      %p163 = scmp.ne.s32.totalorder %s148, %s162
      %p164 = scmp.eq.s32.totalorder %s28, 0
      %p165 = por %p163, %p164
      %s167 = sadd.s32 %s166, 1
      %p170 = scmp.eq.s32.totalorder %s22, 1
      %p171 = scmp.ne.s32.totalorder %s166, %s168
      %p172 = scmp.eq.s32.totalorder %s22, 0
      %p173 = por %p171, %p172
      %p174 = scmp.ne.s32.totalorder %s166, %s168
      %p175 = scmp.eq.s32.totalorder %s27, 1
      %p176 = por %p174, %p175
      %p177 = scmp.ne.s32.totalorder %s168, %s169
      %p178 = scmp.eq.s32.totalorder %s27, 0
      %p179 = por %p177, %p178
      %p180 = scmp.ne.s32.totalorder %s168, %s169
      %p181 = scmp.eq.s32.totalorder %s28, 1
      %p182 = por %p180, %p181
      %p184 = scmp.ne.s32.totalorder %s169, %s183
      %p185 = scmp.eq.s32.totalorder %s28, 0
      %p186 = por %p184, %p185
      %s187 = ssub.s32 %s22, %s29
      %p188 = scmp.eq.s32.totalorder %s187, 0
      %s190 = sadd.s32 %s189, 1
      %s191 = scalar_select %p188, %s189, %s190
      %p194 = pneg %p188
      %p195 = scmp.eq.s32.totalorder %s22, 1
      %p196 = por %p194, %p195
      %p197 = scmp.ne.s32.totalorder %s189, %s192
      %p198 = scmp.eq.s32.totalorder %s22, 0
      %p199 = por %p197, %p198
      %p200 = scmp.ne.s32.totalorder %s189, %s192
      %p201 = scmp.eq.s32.totalorder %s27, 1
      %p202 = por %p200, %p201
      %p203 = scmp.ne.s32.totalorder %s192, %s193
      %p204 = scmp.eq.s32.totalorder %s27, 0
      %p205 = por %p203, %p204
      %p206 = scmp.ne.s32.totalorder %s192, %s193
      %p207 = scmp.eq.s32.totalorder %s28, 1
      %p208 = por %p206, %p207
      %p210 = scmp.ne.s32.totalorder %s193, %s209
      %p211 = scmp.eq.s32.totalorder %s28, 0
      %p212 = por %p210, %p211
      %p213 = scmp.le.s32.totalorder 1, %s22
      %p214 = scmp.lt.s32.totalorder %s22, 3
      %p215 = pnand %p213, %p214
      %p216 = pneg %p215
      // Predicated region
      $region9: #{tpu_custom_call.1} parent=5 // pred_check
        _
      $region10: #{tpu_custom_call.1} parent=5 // pred_check_branch
        %218 = sbr.rel (%p215) target = $region12
      $region11: #{tpu_custom_call.1} parent=5 // pred_region
        %s219 = ssub.s32 %s22, 1
        // Predicated region
        $region13: #{tpu_custom_call.1} parent=11 // pred_check
          %p220 = pneg %p95
        $region14: #{tpu_custom_call.1} parent=11 // pred_check_branch
          %222 = sbr.rel (%p220) target = $region16
        $region15: #{tpu_custom_call.1} parent=11 // pred_region
          _
        $region16: #{tpu_custom_call.1} parent=11 // pred_fallthru
          _
        // Predicated region
        $region17: #{tpu_custom_call.1} parent=11 // pred_check
          %p223 = pneg %p116
        $region18: #{tpu_custom_call.1} parent=11 // pred_check_branch
          %225 = sbr.rel (%p223) target = $region20
        $region19: #{tpu_custom_call.1} parent=11 // pred_region
          %s227 = ssub.s32 768, 768
          %228 = vsyncadd [#allocation8], %s227
          %s229 = sshll.u32 [#allocation9], 4
          %s230 = int_to_ptr.vmem [resolvable:$true] %s229
          %235 = dma.hbm_to_vmem [thread:$0]  %s3, 768, %s230, [#allocation8], 256, 256, 16
        $region20: #{tpu_custom_call.1} parent=11 // pred_fallthru
          _
        // Predicated region
        $region21: #{tpu_custom_call.1} parent=11 // pred_check
          %p236 = pneg %p137
        $region22: #{tpu_custom_call.1} parent=11 // pred_check_branch
          %238 = sbr.rel (%p236) target = $region24
        $region23: #{tpu_custom_call.1} parent=11 // pred_region
          _
        $region24: #{tpu_custom_call.1} parent=11 // pred_fallthru
          _
        // Predicated region
        $region25: #{tpu_custom_call.1} parent=11 // pred_check
          %p239 = pneg %p158
        $region26: #{tpu_custom_call.1} parent=11 // pred_check_branch
          %241 = sbr.rel (%p239) target = $region28
        $region27: #{tpu_custom_call.1} parent=11 // pred_region
          _
        $region28: #{tpu_custom_call.1} parent=11 // pred_fallthru
          _
        // Predicated region
        $region29: #{tpu_custom_call.1} parent=11 // pred_check
          %p242 = pneg %p179
        $region30: #{tpu_custom_call.1} parent=11 // pred_check_branch
          %244 = sbr.rel (%p242) target = $region32
        $region31: #{tpu_custom_call.1} parent=11 // pred_region
          _
        $region32: #{tpu_custom_call.1} parent=11 // pred_fallthru
          _
      $region12: #{tpu_custom_call.1} parent=5 // pred_fallthru
        _
      %p245 = scmp.lt.s32.totalorder %s22, 2
      // Predicated region
      $region33: #{tpu_custom_call.1} parent=5 // pred_check
        %p246 = pneg %p245
      $region34: #{tpu_custom_call.1} parent=5 // pred_check_branch
        %248 = sbr.rel (%p246) target = $region36
      $region35: #{tpu_custom_call.1} parent=5 // pred_region
        // Predicated region
        $region37: #{tpu_custom_call.1} parent=35 // pred_check
          %p249 = pneg %p42
        $region38: #{tpu_custom_call.1} parent=35 // pred_check_branch
          %251 = sbr.rel (%p249) target = $region40
        $region39: #{tpu_custom_call.1} parent=35 // pred_region
          %s252 = sand.u32 %s32, 1
          %s253 = scalar_lea.sflag [#allocation5], %s252
          %s254 = sand.u32 %s32, 1
          %s255 = smul.addr %s254, 8
          %s256 = scalar_lea.vmem [#allocation4], %s255
          %s258 = ssub.s32 128, 128
          %259 = vsyncadd %s253, %s258
          %s260 = smul.addr %s22, 2
          %s261 = smul.addr %s260, 64
          %s262 = scalar_lea.hbm %s0, %s261
          %s264 = sshll.u32 %s256, 4
          %s265 = int_to_ptr.vmem [resolvable:$true] %s264
          %267 = dma.hbm_to_vmem [thread:$0]  %s262, 128, %s265, %s253
        $region40: #{tpu_custom_call.1} parent=35 // pred_fallthru
          _
        // Predicated region
        $region41: #{tpu_custom_call.1} parent=35 // pred_check
          %p268 = pneg %p68
        $region42: #{tpu_custom_call.1} parent=35 // pred_check_branch
          %270 = sbr.rel (%p268) target = $region44
        $region43: #{tpu_custom_call.1} parent=35 // pred_region
          %s271 = sand.u32 %s22, 1
          %s272 = scalar_lea.sflag [#allocation8], %s271
          %s273 = sand.u32 %s58, 1
          %s274 = smul.addr %s273, 16
          %s275 = scalar_lea.vmem [#allocation7], %s274
          %s277 = ssub.s32 256, 256
          %278 = vsyncadd %s272, %s277
          %s279 = smul.addr %s22, 2
          %s280 = smul.addr %s279, 128
          %s281 = scalar_lea.hbm %s1, %s280
          %s283 = sshll.u32 %s275, 4
          %s284 = int_to_ptr.vmem [resolvable:$true] %s283
          %286 = dma.hbm_to_vmem [thread:$0]  %s281, 256, %s284, %s272
        $region44: #{tpu_custom_call.1} parent=35 // pred_fallthru
          _
      $region36: #{tpu_custom_call.1} parent=5 // pred_fallthru
        _
      %p287 = scmp.le.s32.totalorder 1, %s22
      %p288 = scmp.lt.s32.totalorder %s22, 3
      %p289 = pnand %p287, %p288
      %p290 = pneg %p289
      // Predicated region
      $region45: #{tpu_custom_call.1} parent=5 // pred_check
        _
      $region46: #{tpu_custom_call.1} parent=5 // pred_check_branch
        %292 = sbr.rel (%p289) target = $region48
      $region47: #{tpu_custom_call.1} parent=5 // pred_region
        %s293 = ssub.s32 %s22, 1
        %s294 = sand.u32 %s35, 1
        %s295 = scalar_lea.sflag [#allocation5], %s294
        %s296 = sand.u32 %s35, 1
        %s297 = smul.addr %s296, 8
        %s298 = scalar_lea.vmem [#allocation4], %s297
        // Predicated region
        $region49: #{tpu_custom_call.1} parent=47 // pred_check
          %p299 = pneg %p48
        $region50: #{tpu_custom_call.1} parent=47 // pred_check_branch
          %301 = sbr.rel (%p299) target = $region52
        $region51: #{tpu_custom_call.1} parent=47 // pred_region
          %302 = dma.done %s295, 128
        $region52: #{tpu_custom_call.1} parent=47 // pred_fallthru
          _
        %s303 = sand.u32 %s27, 1
        %s304 = scalar_lea.sflag [#allocation8], %s303
        %s305 = sand.u32 %s61, 1
        %s306 = smul.addr %s305, 16
        %s307 = scalar_lea.vmem [#allocation7], %s306
        // Predicated region
        $region53: #{tpu_custom_call.1} parent=47 // pred_check
          %p308 = pneg %p74
        $region54: #{tpu_custom_call.1} parent=47 // pred_check_branch
          %310 = sbr.rel (%p308) target = $region56
        $region55: #{tpu_custom_call.1} parent=47 // pred_region
          %311 = dma.done %s304, 256
        $region56: #{tpu_custom_call.1} parent=47 // pred_fallthru
          _
        // Predicated region
        $region57: #{tpu_custom_call.1} parent=47 // pred_check
          %p312 = pneg %p116
        $region58: #{tpu_custom_call.1} parent=47 // pred_check_branch
          %314 = sbr.rel (%p312) target = $region60
        $region59: #{tpu_custom_call.1} parent=47 // pred_region
          %315 = dma.done [#allocation8], 768
        $region60: #{tpu_custom_call.1} parent=47 // pred_fallthru
          _
        %s316 = sand.u32 %s35, 1
        %s317 = scalar_lea.sflag [#allocation5], %s316
        %s318 = sand.u32 %s35, 1
        %s319 = smul.addr %s318, 8
        %s320 = scalar_lea.vmem [#allocation4], %s319
        %p321 = pneg %p48
        %p322 = pneg %p45
        %s323 = sand.u32 %s27, 1
        %s324 = scalar_lea.sflag [#allocation8], %s323
        %s325 = sand.u32 %s61, 1
        %s326 = smul.addr %s325, 16
        %s327 = scalar_lea.vmem [#allocation7], %s326
        %p328 = pneg %p74
        %p329 = pneg %p71
        %p330 = pneg %p95
        %p331 = pneg %p92
        %p332 = pneg %p116
        %p333 = pneg %p113
        %p334 = pneg %p137
        %p335 = pneg %p134
        %p336 = pneg %p158
        %p337 = pneg %p155
        %p338 = pneg %p179
        %p339 = pneg %p176
        %p340 = pneg %p205
        %p341 = pneg %p202
        %s342 = sand.u32 %s192, 1
        %s343 = scalar_lea.sflag [#allocation6], %s342
        %s344 = sand.u32 %s192, 1
        %s345 = smul.addr %s344, 16
        %s346 = scalar_lea.vmem [#allocation10], %s345
        %v347 = vld [vmem:[%s298] sm:$0xff]
        %v348 = vld [vmem:[%s307] sm:$0xff]
        %v349 = vld [vmem:[%s307 + $0x8] sm:$0xff]
        %v351 = vcombine.high %v347, %v347
        %v355 = vrot.slane %v348, 4
        %v356 = vrot.slane %v349, 4
        %vm359 = vcmask 1043456
        %v360 = vsel %vm359, %v347, %v355
        %v361 = vsel %vm359, %v351, %v356
        %v362 = vsel %vm359, %v355, 0.0
        %v363 = vsel %vm359, %v356, 0.0
        %364 = vrot.lane.b32.xlu0 %v360, 17
        %v365 = vpop.permute.xlu0 %364
        %366 = vrot.lane.b32.xlu0 %v362, 17
        %v367 = vpop.permute.xlu0 %366
        %368 = vrot.lane.b32.xlu0 %v361, 17
        %v369 = vpop.permute.xlu0 %368
        %370 = vrot.lane.b32.xlu0 %v363, 17
        %v371 = vpop.permute.xlu0 %370
        %v372 = vlaneseq
        %v373 = vand.u32 %v372, 127
        %vm374 = vcmp.lt.s32.totalorder %v373, 17
        %v375 = vsel %vm374, %v365, %v369
        %v376 = vsel %vm374, %v367, %v371
        %v377 = vsel %vm374, %v369, %v365
        %v378 = vsel %vm374, %v371, %v367
        %v379 = vld [vmem:[%s2] ss:$8 sm:$0x3]
        %v381 = vlaneseq
        %v382 = vshrl.u32 %v381, 7
        %v383 = vsub.s32 0, %v382
        %v384 = vrot.slane %v379, %v383
        %v385 = vlaneseq
        %v386 = vshrl.u32 %v385, 7
        %v387 = vsub.s32 1, %v386
        %v388 = vrot.slane %v379, %v387
        %v391 = vmul.f32 %v377, %v384
        %v392 = vmul.f32 %v375, %v388
        %v393 = vmul.f32 %v378, %v384
        %v394 = vmul.f32 %v376, %v388
        %395 = vst [vmem:[#allocation2] sm:$0xff] %v391
        %396 = vst [vmem:[#allocation2 + $0x8] sm:$0xff] %v392
        %397 = vst [vmem:[#allocation2 + $0x10] sm:$0xff] %v393
        %398 = vst [vmem:[#allocation2 + $0x18] sm:$0xff] %v394
        %399 = vrot.lane.b32.xlu0 %v360, 16
        %v400 = vpop.permute.xlu0 %399
        %401 = vrot.lane.b32.xlu0 %v362, 16
        %v402 = vpop.permute.xlu0 %401
        %403 = vrot.lane.b32.xlu0 %v361, 16
        %v404 = vpop.permute.xlu0 %403
        %405 = vrot.lane.b32.xlu0 %v363, 16
        %v406 = vpop.permute.xlu0 %405
        %vm407 = vcmp.lt.s32.totalorder %v373, 16
        %v408 = vsel %vm407, %v400, %v404
        %v409 = vsel %vm407, %v402, %v406
        %v410 = vsel %vm407, %v404, %v400
        %v411 = vsel %vm407, %v406, %v402
        %s412 = scalar_lea.vmem %s2, 1
        %v413 = vld [vmem:[%s412] ss:$8 sm:$0x3]
        %v415 = vlaneseq
        %v416 = vshrl.u32 %v415, 7
        %v417 = vsub.s32 0, %v416
        %v418 = vrot.slane %v413, %v417
        %v419 = vlaneseq
        %v420 = vshrl.u32 %v419, 7
        %v421 = vsub.s32 1, %v420
        %v422 = vrot.slane %v413, %v421
        %v425 = vmul.f32 %v410, %v418
        %v426 = vmul.f32 %v408, %v422
        %v427 = vmul.f32 %v411, %v418
        %v428 = vmul.f32 %v409, %v422
        %429 = vst [vmem:[#allocation2 + $0x20] sm:$0xff] %v425
        %430 = vst [vmem:[#allocation2 + $0x28] sm:$0xff] %v426
        %431 = vst [vmem:[#allocation2 + $0x30] sm:$0xff] %v427
        %432 = vst [vmem:[#allocation2 + $0x38] sm:$0xff] %v428
        %433 = vrot.lane.b32.xlu0 %v360, 15
        %v434 = vpop.permute.xlu0 %433
        %435 = vrot.lane.b32.xlu0 %v362, 15
        %v436 = vpop.permute.xlu0 %435
        %437 = vrot.lane.b32.xlu0 %v361, 15
        %v438 = vpop.permute.xlu0 %437
        %439 = vrot.lane.b32.xlu0 %v363, 15
        %v440 = vpop.permute.xlu0 %439
        %vm441 = vcmp.lt.s32.totalorder %v373, 15
        %v442 = vsel %vm441, %v434, %v438
        %v443 = vsel %vm441, %v436, %v440
        %v444 = vsel %vm441, %v438, %v434
        %v445 = vsel %vm441, %v440, %v436
        %s446 = scalar_lea.vmem %s2, 2
        %v447 = vld [vmem:[%s446] ss:$8 sm:$0x3]
        %v449 = vlaneseq
        %v450 = vshrl.u32 %v449, 7
        %v451 = vsub.s32 0, %v450
        %v452 = vrot.slane %v447, %v451
        %v453 = vlaneseq
        %v454 = vshrl.u32 %v453, 7
        %v455 = vsub.s32 1, %v454
        %v456 = vrot.slane %v447, %v455
        %v459 = vmul.f32 %v444, %v452
        %v460 = vmul.f32 %v442, %v456
        %v461 = vmul.f32 %v445, %v452
        %v462 = vmul.f32 %v443, %v456
        %463 = vst [vmem:[#allocation2 + $0x40] sm:$0xff] %v459
        %464 = vst [vmem:[#allocation2 + $0x48] sm:$0xff] %v460
        %465 = vst [vmem:[#allocation2 + $0x50] sm:$0xff] %v461
        %466 = vst [vmem:[#allocation2 + $0x58] sm:$0xff] %v462
        %467 = vrot.lane.b32.xlu0 %v360, 1
        %v468 = vpop.permute.xlu0 %467
        %469 = vrot.lane.b32.xlu0 %v362, 1
        %v470 = vpop.permute.xlu0 %469
        %471 = vrot.lane.b32.xlu0 %v361, 1
        %v472 = vpop.permute.xlu0 %471
        %473 = vrot.lane.b32.xlu0 %v363, 1
        %v474 = vpop.permute.xlu0 %473
        %vm475 = vcmp.lt.s32.totalorder %v373, 1
        %v476 = vsel %vm475, %v468, %v472
        %v477 = vsel %vm475, %v470, %v474
        %v478 = vsel %vm475, %v472, %v468
        %v479 = vsel %vm475, %v474, %v470
        %s480 = scalar_lea.vmem %s2, 3
        %v481 = vld [vmem:[%s480] ss:$8 sm:$0x3]
        %v483 = vlaneseq
        %v484 = vshrl.u32 %v483, 7
        %v485 = vsub.s32 0, %v484
        %v486 = vrot.slane %v481, %v485
        %v487 = vlaneseq
        %v488 = vshrl.u32 %v487, 7
        %v489 = vsub.s32 1, %v488
        %v490 = vrot.slane %v481, %v489
        %v493 = vmul.f32 %v478, %v486
        %v494 = vmul.f32 %v476, %v490
        %v495 = vmul.f32 %v479, %v486
        %v496 = vmul.f32 %v477, %v490
        %497 = vst [vmem:[#allocation2 + $0x60] sm:$0xff] %v493
        %498 = vst [vmem:[#allocation2 + $0x68] sm:$0xff] %v494
        %499 = vst [vmem:[#allocation2 + $0x70] sm:$0xff] %v495
        %500 = vst [vmem:[#allocation2 + $0x78] sm:$0xff] %v496
        %501 = vst [vmem:[#allocation2 + $0x80] sm:$0xff] %v360
        %502 = vst [vmem:[#allocation2 + $0x88] sm:$0xff] %v361
        %503 = vst [vmem:[#allocation2 + $0x90] sm:$0xff] %v362
        %504 = vst [vmem:[#allocation2 + $0x98] sm:$0xff] %v363
        %505 = vrot.lane.b32.xlu0 %v360, 127
        %v506 = vpop.permute.xlu0 %505
        %507 = vrot.lane.b32.xlu0 %v362, 127
        %v508 = vpop.permute.xlu0 %507
        %509 = vrot.lane.b32.xlu0 %v361, 127
        %v510 = vpop.permute.xlu0 %509
        %511 = vrot.lane.b32.xlu0 %v363, 127
        %v512 = vpop.permute.xlu0 %511
        %vm513 = vcmp.lt.s32.totalorder %v373, 127
        %v514 = vsel %vm513, %v506, %v510
        %v515 = vsel %vm513, %v508, %v512
        %v516 = vsel %vm513, %v510, %v506
        %v517 = vsel %vm513, %v512, %v508
        %s518 = scalar_lea.vmem %s2, 5
        %v519 = vld [vmem:[%s518] ss:$8 sm:$0x3]
        %v521 = vlaneseq
        %v522 = vshrl.u32 %v521, 7
        %v523 = vsub.s32 0, %v522
        %v524 = vrot.slane %v519, %v523
        %v525 = vlaneseq
        %v526 = vshrl.u32 %v525, 7
        %v527 = vsub.s32 1, %v526
        %v528 = vrot.slane %v519, %v527
        %v531 = vmul.f32 %v514, %v524
        %v532 = vmul.f32 %v516, %v528
        %v533 = vmul.f32 %v515, %v524
        %v534 = vmul.f32 %v517, %v528
        %535 = vst [vmem:[#allocation2 + $0xa0] sm:$0xff] %v531
        %536 = vst [vmem:[#allocation2 + $0xa8] sm:$0xff] %v532
        %537 = vst [vmem:[#allocation2 + $0xb0] sm:$0xff] %v533
        %538 = vst [vmem:[#allocation2 + $0xb8] sm:$0xff] %v534
        %539 = vrot.lane.b32.xlu0 %v360, 113
        %v540 = vpop.permute.xlu0 %539
        %541 = vrot.lane.b32.xlu0 %v362, 113
        %v542 = vpop.permute.xlu0 %541
        %543 = vrot.lane.b32.xlu0 %v361, 113
        %v544 = vpop.permute.xlu0 %543
        %545 = vrot.lane.b32.xlu0 %v363, 113
        %v546 = vpop.permute.xlu0 %545
        %vm547 = vcmp.lt.s32.totalorder %v373, 113
        %v548 = vsel %vm547, %v540, %v544
        %v549 = vsel %vm547, %v542, %v546
        %v550 = vsel %vm547, %v544, %v540
        %v551 = vsel %vm547, %v546, %v542
        %s552 = scalar_lea.vmem %s2, 6
        %v553 = vld [vmem:[%s552] ss:$8 sm:$0x3]
        %v555 = vlaneseq
        %v556 = vshrl.u32 %v555, 7
        %v557 = vsub.s32 0, %v556
        %v558 = vrot.slane %v553, %v557
        %v559 = vlaneseq
        %v560 = vshrl.u32 %v559, 7
        %v561 = vsub.s32 1, %v560
        %v562 = vrot.slane %v553, %v561
        %v565 = vmul.f32 %v548, %v558
        %v566 = vmul.f32 %v550, %v562
        %v567 = vmul.f32 %v549, %v558
        %v568 = vmul.f32 %v551, %v562
        %569 = vst [vmem:[#allocation2 + $0xc0] sm:$0xff] %v565
        %570 = vst [vmem:[#allocation2 + $0xc8] sm:$0xff] %v566
        %571 = vst [vmem:[#allocation2 + $0xd0] sm:$0xff] %v567
        %572 = vst [vmem:[#allocation2 + $0xd8] sm:$0xff] %v568
        %573 = vrot.lane.b32.xlu0 %v360, 112
        %v574 = vpop.permute.xlu0 %573
        %575 = vrot.lane.b32.xlu0 %v362, 112
        %v576 = vpop.permute.xlu0 %575
        %577 = vrot.lane.b32.xlu0 %v361, 112
        %v578 = vpop.permute.xlu0 %577
        %579 = vrot.lane.b32.xlu0 %v363, 112
        %v580 = vpop.permute.xlu0 %579
        %vm581 = vcmp.lt.s32.totalorder %v373, 112
        %v582 = vsel %vm581, %v574, %v578
        %v583 = vsel %vm581, %v576, %v580
        %v584 = vsel %vm581, %v578, %v574
        %v585 = vsel %vm581, %v580, %v576
        %s586 = scalar_lea.vmem %s2, 7
        %v587 = vld [vmem:[%s586] ss:$8 sm:$0x3]
        %v589 = vlaneseq
        %v590 = vshrl.u32 %v589, 7
        %v591 = vsub.s32 0, %v590
        %v592 = vrot.slane %v587, %v591
        %v593 = vlaneseq
        %v594 = vshrl.u32 %v593, 7
        %v595 = vsub.s32 1, %v594
        %v596 = vrot.slane %v587, %v595
        %v599 = vmul.f32 %v582, %v592
        %v600 = vmul.f32 %v584, %v596
        %v601 = vmul.f32 %v583, %v592
        %v602 = vmul.f32 %v585, %v596
        %603 = vst [vmem:[#allocation2 + $0xe0] sm:$0xff] %v599
        %604 = vst [vmem:[#allocation2 + $0xe8] sm:$0xff] %v600
        %605 = vst [vmem:[#allocation2 + $0xf0] sm:$0xff] %v601
        %606 = vst [vmem:[#allocation2 + $0xf8] sm:$0xff] %v602
        %607 = vrot.lane.b32.xlu0 %v360, 111
        %v608 = vpop.permute.xlu0 %607
        %609 = vrot.lane.b32.xlu0 %v362, 111
        %v610 = vpop.permute.xlu0 %609
        %611 = vrot.lane.b32.xlu0 %v361, 111
        %v612 = vpop.permute.xlu0 %611
        %613 = vrot.lane.b32.xlu0 %v363, 111
        %v614 = vpop.permute.xlu0 %613
        %vm615 = vcmp.lt.s32.totalorder %v373, 111
        %v616 = vsel %vm615, %v608, %v612
        %v617 = vsel %vm615, %v610, %v614
        %v618 = vsel %vm615, %v612, %v608
        %v619 = vsel %vm615, %v614, %v610
        %s620 = scalar_lea.vmem %s2, 16
        %v621 = vld [vmem:[%s620] ss:$8 sm:$0x3]
        %v623 = vlaneseq
        %v624 = vshrl.u32 %v623, 7
        %v625 = vsub.s32 0, %v624
        %v626 = vrot.slane %v621, %v625
        %v627 = vlaneseq
        %v628 = vshrl.u32 %v627, 7
        %v629 = vsub.s32 1, %v628
        %v630 = vrot.slane %v621, %v629
        %v633 = vmul.f32 %v616, %v626
        %v634 = vmul.f32 %v618, %v630
        %v635 = vmul.f32 %v617, %v626
        %v636 = vmul.f32 %v619, %v630
        %637 = vst [vmem:[#allocation2 + $0x100] sm:$0xff] %v633
        %638 = vst [vmem:[#allocation2 + $0x108] sm:$0xff] %v634
        %639 = vst [vmem:[#allocation2 + $0x110] sm:$0xff] %v635
        %640 = vst [vmem:[#allocation2 + $0x118] sm:$0xff] %v636
        %v641 = vld [vmem:[#allocation9] sm:$0xff]
        %v642 = vld [vmem:[#allocation9 + $0x8] sm:$0xff]
        %v643 = vld [vmem:[#allocation9 + $0x10] sm:$0xff]
        %v644 = vld [vmem:[#allocation9 + $0x18] sm:$0xff]
        %v645 = vld [vmem:[#allocation9 + $0x20] sm:$0xff]
        %v646 = vld [vmem:[#allocation9 + $0x28] sm:$0xff]
        %v647 = vld [vmem:[#allocation2] sm:$0xff]
        %v648 = vld [vmem:[#allocation2 + $0x8] sm:$0xff]
        %v649 = vld [vmem:[#allocation2 + $0x10] sm:$0xff]
        %v650 = vld [vmem:[#allocation2 + $0x18] sm:$0xff]
        %v651 = vld [vmem:[#allocation2 + $0x20] sm:$0xff]
        %v652 = vld [vmem:[#allocation2 + $0x28] sm:$0xff]
        %v653 = vld [vmem:[#allocation2 + $0x30] sm:$0xff]
        %v654 = vld [vmem:[#allocation2 + $0x38] sm:$0xff]
        %v655 = vld [vmem:[#allocation2 + $0x40] sm:$0xff]
        %v656 = vld [vmem:[#allocation2 + $0x48] sm:$0xff]
        %v657 = vld [vmem:[#allocation2 + $0x50] sm:$0xff]
        %v658 = vld [vmem:[#allocation2 + $0x58] sm:$0xff]
        %v659 = vld [vmem:[#allocation2 + $0x60] sm:$0xff]
        %v660 = vld [vmem:[#allocation2 + $0x68] sm:$0xff]
        %v661 = vld [vmem:[#allocation2 + $0x70] sm:$0xff]
        %v662 = vld [vmem:[#allocation2 + $0x78] sm:$0xff]
        %v663 = vld [vmem:[#allocation2 + $0x80] sm:$0xff]
        %v664 = vld [vmem:[#allocation2 + $0x88] sm:$0xff]
        %v665 = vld [vmem:[#allocation2 + $0x90] sm:$0xff]
        %v666 = vld [vmem:[#allocation2 + $0x98] sm:$0xff]
        %v667 = vld [vmem:[#allocation2 + $0xa0] sm:$0xff]
        %v668 = vld [vmem:[#allocation2 + $0xa8] sm:$0xff]
        %v669 = vld [vmem:[#allocation2 + $0xb0] sm:$0xff]
        %v670 = vld [vmem:[#allocation2 + $0xb8] sm:$0xff]
        %v671 = vld [vmem:[#allocation2 + $0xc0] sm:$0xff]
        %v672 = vld [vmem:[#allocation2 + $0xc8] sm:$0xff]
        %v673 = vld [vmem:[#allocation2 + $0xd0] sm:$0xff]
        %v674 = vld [vmem:[#allocation2 + $0xd8] sm:$0xff]
        %v675 = vld [vmem:[#allocation2 + $0xe0] sm:$0xff]
        %v676 = vld [vmem:[#allocation2 + $0xe8] sm:$0xff]
        %v677 = vld [vmem:[#allocation2 + $0xf0] sm:$0xff]
        %v678 = vld [vmem:[#allocation2 + $0xf8] sm:$0xff]
        %v679 = vld [vmem:[#allocation2 + $0x100] sm:$0xff]
        %v680 = vld [vmem:[#allocation2 + $0x108] sm:$0xff]
        %v681 = vld [vmem:[#allocation2 + $0x110] sm:$0xff]
        %v682 = vld [vmem:[#allocation2 + $0x118] sm:$0xff]
        %vm683 = vcmask 130048
        %v685 = vsel %vm683, %v642, 0
        %v688 = vsel %vm683, %v644, 0
        %v691 = vsel %vm683, %v646, 0
        %v693 = vand.u32 %v648, 4294901760
        %694 = vmatprep.subr.mxu0 %v693
        %v695 = vand.u32 %v647, 4294901760
        %696 = vmatpush1.msra.mxu0 %v695
        %v697 = vand.u32 %v650, 4294901760
        %698 = vmatprep.subr.mxu0 %v697
        %v699 = vand.u32 %v649, 4294901760
        %700 = vmatpush1.msra.mxu0 %v699
        %v701 = vand.u32 %v652, 4294901760
        %702 = vmatprep.subr.mxu0 %v701
        %v703 = vand.u32 %v651, 4294901760
        %704 = vmatpush1.msra.mxu0 %v703
        %v705 = vand.u32 %v654, 4294901760
        %706 = vmatprep.subr.mxu0 %v705
        %v707 = vand.u32 %v653, 4294901760
        %708 = vmatpush1.msra.mxu0 %v707
        %v709 = vand.u32 %v656, 4294901760
        %710 = vmatprep.subr.mxu0 %v709
        %v711 = vand.u32 %v655, 4294901760
        %712 = vmatpush1.msra.mxu0 %v711
        %v713 = vand.u32 %v658, 4294901760
        %714 = vmatprep.subr.mxu0 %v713
        %v715 = vand.u32 %v657, 4294901760
        %716 = vmatpush1.msra.mxu0 %v715
        %v717 = vand.u32 %v660, 4294901760
        %718 = vmatprep.subr.mxu0 %v717
        %v719 = vand.u32 %v659, 4294901760
        %720 = vmatpush1.msra.mxu0 %v719
        %v721 = vand.u32 %v662, 4294901760
        %722 = vmatprep.subr.mxu0 %v721
        %v723 = vand.u32 %v661, 4294901760
        %724 = vmatpush1.msra.mxu0 %v723
        %v725 = vand.u32 %v664, 4294901760
        %726 = vmatprep.subr.mxu0 %v725
        %v727 = vand.u32 %v663, 4294901760
        %728 = vmatpush1.msra.mxu0 %v727
        %v729 = vand.u32 %v666, 4294901760
        %730 = vmatprep.subr.mxu0 %v729
        %v731 = vand.u32 %v665, 4294901760
        %732 = vmatpush1.msra.mxu0 %v731
        %v733 = vand.u32 %v668, 4294901760
        %734 = vmatprep.subr.mxu0 %v733
        %v735 = vand.u32 %v667, 4294901760
        %736 = vmatpush1.msra.mxu0 %v735
        %v737 = vand.u32 %v670, 4294901760
        %738 = vmatprep.subr.mxu0 %v737
        %v739 = vand.u32 %v669, 4294901760
        %740 = vmatpush1.msra.mxu0 %v739
        %v741 = vand.u32 %v672, 4294901760
        %742 = vmatprep.subr.mxu0 %v741
        %v743 = vand.u32 %v671, 4294901760
        %744 = vmatpush1.msra.mxu0 %v743
        %v745 = vand.u32 %v674, 4294901760
        %746 = vmatprep.subr.mxu0 %v745
        %v747 = vand.u32 %v673, 4294901760
        %748 = vmatpush1.msra.mxu0 %v747
        %v749 = vand.u32 %v676, 4294901760
        %750 = vmatprep.subr.mxu0 %v749
        %v751 = vand.u32 %v675, 4294901760
        %752 = vmatpush1.msra.mxu0 %v751
        %v753 = vand.u32 %v678, 4294901760
        %754 = vmatprep.subr.mxu0 %v753
        %v755 = vand.u32 %v677, 4294901760
        %756 = vmatpush1.msra.mxu0 %v755
        %v757 = vand.u32 %v680, 4294901760
        %758 = vmatprep.subr.mxu0 %v757
        %v759 = vand.u32 %v679, 4294901760
        %760 = vmatpush1.msra.mxu0 %v759
        %v761 = vand.u32 %v682, 4294901760
        %762 = vmatprep.subr.mxu0 %v761
        %v763 = vand.u32 %v681, 4294901760
        %764 = vmatpush1.msra.mxu0 %v763
        %765 = vmatprep.subr.mxu0 0.0
        %766 = vmatpush1.msra.mxu0 0.0
        %767 = vmatprep.subr.mxu0 0.0
        %768 = vmatpush1.msra.mxu0 0.0
        %769 = vmatprep.subr.mxu0 0.0
        %770 = vmatpush1.msra.mxu0 0.0
        %771 = vmatprep.subr.mxu0 0.0
        %772 = vmatpush1.msra.mxu0 0.0
        %773 = vmatprep.subr.mxu0 0.0
        %774 = vmatpush1.msra.mxu0 0.0
        %775 = vmatprep.subr.mxu0 0.0
        %776 = vmatpush1.msra.mxu0 0.0
        %777 = vmatprep.subr.mxu0 0.0
        %778 = vmatpush1.msra.mxu0 0.0
        %779 = vmatprep.subr.mxu0 0.0
        %780 = vmatpush1.msra.mxu0 0.0
        %781 = vmatprep.subr.mxu0 0.0
        %782 = vmatpush1.msra.mxu0 0.0
        %783 = vmatprep.subr.mxu0 0.0
        %784 = vmatpush1.msra.mxu0 0.0
        %785 = vmatprep.subr.mxu0 0.0
        %786 = vmatpush1.msra.mxu0 0.0
        %787 = vmatprep.subr.mxu0 0.0
        %788 = vmatpush1.msra.mxu0 0.0
        %789 = vmatprep.subr.mxu0 0.0
        %790 = vmatpush1.msra.mxu0 0.0
        %791 = vmatprep.subr.mxu0 0.0
        %792 = vmatpush1.msra.mxu0 0.0
        %v793 = vand.u32 %v685, 4294901760
        %v794 = vsub.f32 %v685, %v793
        %v795 = vand.u32 %v794, 4294901760
        %v796 = vsub.f32 %v794, %v795
        %v797 = vand.u32 %v796, 4294901760
        %798 = vmatprep.mubr.f32.mxu0 %v797
        %v799 = vand.u32 %v641, 4294901760
        %v800 = vsub.f32 %v641, %v799
        %v801 = vand.u32 %v800, 4294901760
        %v802 = vsub.f32 %v800, %v801
        %v803 = vand.u32 %v802, 4294901760
        %804 = vmatmul.mubr.f32.gmra.mrb[0].mxu0 %v803
        %v805 = vpop.f32.mrb[0].mxu0
        %v806 = vadd.f32 0.0, %v805
        %v807 = vpop.f32.mrb[0].mxu0
        %v808 = vadd.f32 0.0, %v807
        %v809 = vand.u32 %v688, 4294901760
        %v810 = vsub.f32 %v688, %v809
        %v811 = vand.u32 %v810, 4294901760
        %v812 = vsub.f32 %v810, %v811
        %v813 = vand.u32 %v812, 4294901760
        %814 = vmatprep.mubr.f32.mxu0 %v813
        %v815 = vand.u32 %v643, 4294901760
        %v816 = vsub.f32 %v643, %v815
        %v817 = vand.u32 %v816, 4294901760
        %v818 = vsub.f32 %v816, %v817
        %v819 = vand.u32 %v818, 4294901760
        %820 = vmatmul.mubr.f32.gmra.mrb[0].mxu0 %v819
        %v821 = vpop.f32.mrb[0].mxu0
        %v822 = vadd.f32 0.0, %v821
        %v823 = vpop.f32.mrb[0].mxu0
        %v824 = vadd.f32 0.0, %v823
        %v825 = vand.u32 %v691, 4294901760
        %v826 = vsub.f32 %v691, %v825
        %v827 = vand.u32 %v826, 4294901760
        %v828 = vsub.f32 %v826, %v827
        %v829 = vand.u32 %v828, 4294901760
        %830 = vmatprep.mubr.f32.mxu0 %v829
        %v831 = vand.u32 %v645, 4294901760
        %v832 = vsub.f32 %v645, %v831
        %v833 = vand.u32 %v832, 4294901760
        %v834 = vsub.f32 %v832, %v833
        %v835 = vand.u32 %v834, 4294901760
        %836 = vmatmul.mubr.f32.gmra.mrb[0].mxu0 %v835
        %v837 = vpop.f32.mrb[0].mxu0
        %v838 = vadd.f32 0.0, %v837
        %v839 = vpop.f32.mrb[0].mxu0
        %v840 = vadd.f32 0.0, %v839
        %841 = vdwg.mxu0
        %v842 = vand.u32 %v648, 4294901760
        %v843 = vsub.f32 %v648, %v842
        %v844 = vand.u32 %v843, 4294901760
        %v845 = vsub.f32 %v843, %v844
        %v846 = vand.u32 %v845, 4294901760
        %847 = vmatprep.subr.mxu0 %v846
        %v848 = vand.u32 %v647, 4294901760
        %v849 = vsub.f32 %v647, %v848
        %v850 = vand.u32 %v849, 4294901760
        %v851 = vsub.f32 %v849, %v850
        %v852 = vand.u32 %v851, 4294901760
        %853 = vmatpush1.msra.mxu0 %v852
        %v854 = vand.u32 %v650, 4294901760
        %v855 = vsub.f32 %v650, %v854
        %v856 = vand.u32 %v855, 4294901760
        %v857 = vsub.f32 %v855, %v856
        %v858 = vand.u32 %v857, 4294901760
        %859 = vmatprep.subr.mxu0 %v858
        %v860 = vand.u32 %v649, 4294901760
        %v861 = vsub.f32 %v649, %v860
        %v862 = vand.u32 %v861, 4294901760
        %v863 = vsub.f32 %v861, %v862
        %v864 = vand.u32 %v863, 4294901760
        %865 = vmatpush1.msra.mxu0 %v864
        %v866 = vand.u32 %v652, 4294901760
        %v867 = vsub.f32 %v652, %v866
        %v868 = vand.u32 %v867, 4294901760
        %v869 = vsub.f32 %v867, %v868
        %v870 = vand.u32 %v869, 4294901760
        %871 = vmatprep.subr.mxu0 %v870
        %v872 = vand.u32 %v651, 4294901760
        %v873 = vsub.f32 %v651, %v872
        %v874 = vand.u32 %v873, 4294901760
        %v875 = vsub.f32 %v873, %v874
        %v876 = vand.u32 %v875, 4294901760
        %877 = vmatpush1.msra.mxu0 %v876
        %v878 = vand.u32 %v654, 4294901760
        %v879 = vsub.f32 %v654, %v878
        %v880 = vand.u32 %v879, 4294901760
        %v881 = vsub.f32 %v879, %v880
        %v882 = vand.u32 %v881, 4294901760
        %883 = vmatprep.subr.mxu0 %v882
        %v884 = vand.u32 %v653, 4294901760
        %v885 = vsub.f32 %v653, %v884
        %v886 = vand.u32 %v885, 4294901760
        %v887 = vsub.f32 %v885, %v886
        %v888 = vand.u32 %v887, 4294901760
        %889 = vmatpush1.msra.mxu0 %v888
        %v890 = vand.u32 %v656, 4294901760
        %v891 = vsub.f32 %v656, %v890
        %v892 = vand.u32 %v891, 4294901760
        %v893 = vsub.f32 %v891, %v892
        %v894 = vand.u32 %v893, 4294901760
        %895 = vmatprep.subr.mxu0 %v894
        %v896 = vand.u32 %v655, 4294901760
        %v897 = vsub.f32 %v655, %v896
        %v898 = vand.u32 %v897, 4294901760
        %v899 = vsub.f32 %v897, %v898
        %v900 = vand.u32 %v899, 4294901760
        %901 = vmatpush1.msra.mxu0 %v900
        %v902 = vand.u32 %v658, 4294901760
        %v903 = vsub.f32 %v658, %v902
        %v904 = vand.u32 %v903, 4294901760
        %v905 = vsub.f32 %v903, %v904
        %v906 = vand.u32 %v905, 4294901760
        %907 = vmatprep.subr.mxu0 %v906
        %v908 = vand.u32 %v657, 4294901760
        %v909 = vsub.f32 %v657, %v908
        %v910 = vand.u32 %v909, 4294901760
        %v911 = vsub.f32 %v909, %v910
        %v912 = vand.u32 %v911, 4294901760
        %913 = vmatpush1.msra.mxu0 %v912
        %v914 = vand.u32 %v660, 4294901760
        %v915 = vsub.f32 %v660, %v914
        %v916 = vand.u32 %v915, 4294901760
        %v917 = vsub.f32 %v915, %v916
        %v918 = vand.u32 %v917, 4294901760
        %919 = vmatprep.subr.mxu0 %v918
        %v920 = vand.u32 %v659, 4294901760
        %v921 = vsub.f32 %v659, %v920
        %v922 = vand.u32 %v921, 4294901760
        %v923 = vsub.f32 %v921, %v922
        %v924 = vand.u32 %v923, 4294901760
        %925 = vmatpush1.msra.mxu0 %v924
        %v926 = vand.u32 %v662, 4294901760
        %v927 = vsub.f32 %v662, %v926
        %v928 = vand.u32 %v927, 4294901760
        %v929 = vsub.f32 %v927, %v928
        %v930 = vand.u32 %v929, 4294901760
        %931 = vmatprep.subr.mxu0 %v930
        %v932 = vand.u32 %v661, 4294901760
        %v933 = vsub.f32 %v661, %v932
        %v934 = vand.u32 %v933, 4294901760
        %v935 = vsub.f32 %v933, %v934
        %v936 = vand.u32 %v935, 4294901760
        %937 = vmatpush1.msra.mxu0 %v936
        %v938 = vand.u32 %v664, 4294901760
        %v939 = vsub.f32 %v664, %v938
        %v940 = vand.u32 %v939, 4294901760
        %v941 = vsub.f32 %v939, %v940
        %v942 = vand.u32 %v941, 4294901760
        %943 = vmatprep.subr.mxu0 %v942
        %v944 = vand.u32 %v663, 4294901760
        %v945 = vsub.f32 %v663, %v944
        %v946 = vand.u32 %v945, 4294901760
        %v947 = vsub.f32 %v945, %v946
        %v948 = vand.u32 %v947, 4294901760
        %949 = vmatpush1.msra.mxu0 %v948
        %v950 = vand.u32 %v666, 4294901760
        %v951 = vsub.f32 %v666, %v950
        %v952 = vand.u32 %v951, 4294901760
        %v953 = vsub.f32 %v951, %v952
        %v954 = vand.u32 %v953, 4294901760
        %955 = vmatprep.subr.mxu0 %v954
        %v956 = vand.u32 %v665, 4294901760
        %v957 = vsub.f32 %v665, %v956
        %v958 = vand.u32 %v957, 4294901760
        %v959 = vsub.f32 %v957, %v958
        %v960 = vand.u32 %v959, 4294901760
        %961 = vmatpush1.msra.mxu0 %v960
        %v962 = vand.u32 %v668, 4294901760
        %v963 = vsub.f32 %v668, %v962
        %v964 = vand.u32 %v963, 4294901760
        %v965 = vsub.f32 %v963, %v964
        %v966 = vand.u32 %v965, 4294901760
        %967 = vmatprep.subr.mxu0 %v966
        %v968 = vand.u32 %v667, 4294901760
        %v969 = vsub.f32 %v667, %v968
        %v970 = vand.u32 %v969, 4294901760
        %v971 = vsub.f32 %v969, %v970
        %v972 = vand.u32 %v971, 4294901760
        %973 = vmatpush1.msra.mxu0 %v972
        %v974 = vand.u32 %v670, 4294901760
        %v975 = vsub.f32 %v670, %v974
        %v976 = vand.u32 %v975, 4294901760
        %v977 = vsub.f32 %v975, %v976
        %v978 = vand.u32 %v977, 4294901760
        %979 = vmatprep.subr.mxu0 %v978
        %v980 = vand.u32 %v669, 4294901760
        %v981 = vsub.f32 %v669, %v980
        %v982 = vand.u32 %v981, 4294901760
        %v983 = vsub.f32 %v981, %v982
        %v984 = vand.u32 %v983, 4294901760
        %985 = vmatpush1.msra.mxu0 %v984
        %v986 = vand.u32 %v672, 4294901760
        %v987 = vsub.f32 %v672, %v986
        %v988 = vand.u32 %v987, 4294901760
        %v989 = vsub.f32 %v987, %v988
        %v990 = vand.u32 %v989, 4294901760
        %991 = vmatprep.subr.mxu0 %v990
        %v992 = vand.u32 %v671, 4294901760
        %v993 = vsub.f32 %v671, %v992
        %v994 = vand.u32 %v993, 4294901760
        %v995 = vsub.f32 %v993, %v994
        %v996 = vand.u32 %v995, 4294901760
        %997 = vmatpush1.msra.mxu0 %v996
        %v998 = vand.u32 %v674, 4294901760
        %v999 = vsub.f32 %v674, %v998
        %v1000 = vand.u32 %v999, 4294901760
        %v1001 = vsub.f32 %v999, %v1000
        %v1002 = vand.u32 %v1001, 4294901760
        %1003 = vmatprep.subr.mxu0 %v1002
        %v1004 = vand.u32 %v673, 4294901760
        %v1005 = vsub.f32 %v673, %v1004
        %v1006 = vand.u32 %v1005, 4294901760
        %v1007 = vsub.f32 %v1005, %v1006
        %v1008 = vand.u32 %v1007, 4294901760
        %1009 = vmatpush1.msra.mxu0 %v1008
        %v1010 = vand.u32 %v676, 4294901760
        %v1011 = vsub.f32 %v676, %v1010
        %v1012 = vand.u32 %v1011, 4294901760
        %v1013 = vsub.f32 %v1011, %v1012
        %v1014 = vand.u32 %v1013, 4294901760
        %1015 = vmatprep.subr.mxu0 %v1014
        %v1016 = vand.u32 %v675, 4294901760
        %v1017 = vsub.f32 %v675, %v1016
        %v1018 = vand.u32 %v1017, 4294901760
        %v1019 = vsub.f32 %v1017, %v1018
        %v1020 = vand.u32 %v1019, 4294901760
        %1021 = vmatpush1.msra.mxu0 %v1020
        %v1022 = vand.u32 %v678, 4294901760
        %v1023 = vsub.f32 %v678, %v1022
        %v1024 = vand.u32 %v1023, 4294901760
        %v1025 = vsub.f32 %v1023, %v1024
        %v1026 = vand.u32 %v1025, 4294901760
        %1027 = vmatprep.subr.mxu0 %v1026
        %v1028 = vand.u32 %v677, 4294901760
        %v1029 = vsub.f32 %v677, %v1028
        %v1030 = vand.u32 %v1029, 4294901760
        %v1031 = vsub.f32 %v1029, %v1030
        %v1032 = vand.u32 %v1031, 4294901760
        %1033 = vmatpush1.msra.mxu0 %v1032
        %v1034 = vand.u32 %v680, 4294901760
        %v1035 = vsub.f32 %v680, %v1034
        %v1036 = vand.u32 %v1035, 4294901760
        %v1037 = vsub.f32 %v1035, %v1036
        %v1038 = vand.u32 %v1037, 4294901760
        %1039 = vmatprep.subr.mxu0 %v1038
        %v1040 = vand.u32 %v679, 4294901760
        %v1041 = vsub.f32 %v679, %v1040
        %v1042 = vand.u32 %v1041, 4294901760
        %v1043 = vsub.f32 %v1041, %v1042
        %v1044 = vand.u32 %v1043, 4294901760
        %1045 = vmatpush1.msra.mxu0 %v1044
        %v1046 = vand.u32 %v682, 4294901760
        %v1047 = vsub.f32 %v682, %v1046
        %v1048 = vand.u32 %v1047, 4294901760
        %v1049 = vsub.f32 %v1047, %v1048
        %v1050 = vand.u32 %v1049, 4294901760
        %1051 = vmatprep.subr.mxu0 %v1050
        %v1052 = vand.u32 %v681, 4294901760
        %v1053 = vsub.f32 %v681, %v1052
        %v1054 = vand.u32 %v1053, 4294901760
        %v1055 = vsub.f32 %v1053, %v1054
        %v1056 = vand.u32 %v1055, 4294901760
        %1057 = vmatpush1.msra.mxu0 %v1056
        %1058 = vmatprep.subr.mxu0 0.0
        %1059 = vmatpush1.msra.mxu0 0.0
        %1060 = vmatprep.subr.mxu0 0.0
        %1061 = vmatpush1.msra.mxu0 0.0
        %1062 = vmatprep.subr.mxu0 0.0
        %1063 = vmatpush1.msra.mxu0 0.0
        %1064 = vmatprep.subr.mxu0 0.0
        %1065 = vmatpush1.msra.mxu0 0.0
        %1066 = vmatprep.subr.mxu0 0.0
        %1067 = vmatpush1.msra.mxu0 0.0
        %1068 = vmatprep.subr.mxu0 0.0
        %1069 = vmatpush1.msra.mxu0 0.0
        %1070 = vmatprep.subr.mxu0 0.0
        %1071 = vmatpush1.msra.mxu0 0.0
        %1072 = vmatprep.subr.mxu0 0.0
        %1073 = vmatpush1.msra.mxu0 0.0
        %1074 = vmatprep.subr.mxu0 0.0
        %1075 = vmatpush1.msra.mxu0 0.0
        %1076 = vmatprep.subr.mxu0 0.0
        %1077 = vmatpush1.msra.mxu0 0.0
        %1078 = vmatprep.subr.mxu0 0.0
        %1079 = vmatpush1.msra.mxu0 0.0
        %1080 = vmatprep.subr.mxu0 0.0
        %1081 = vmatpush1.msra.mxu0 0.0
        %1082 = vmatprep.subr.mxu0 0.0
        %1083 = vmatpush1.msra.mxu0 0.0
        %1084 = vmatprep.subr.mxu0 0.0
        %1085 = vmatpush1.msra.mxu0 0.0
        %v1086 = vand.u32 %v685, 4294901760
        %1087 = vmatprep.mubr.f32.mxu0 %v1086
        %v1088 = vand.u32 %v641, 4294901760
        %1089 = vmatmul.mubr.f32.gmra.mrb[0].mxu0 %v1088
        %v1090 = vpop.f32.mrb[0].mxu0
        %v1091 = vadd.f32 %v806, %v1090
        %v1092 = vpop.f32.mrb[0].mxu0
        %v1093 = vadd.f32 %v808, %v1092
        %v1094 = vand.u32 %v688, 4294901760
        %1095 = vmatprep.mubr.f32.mxu0 %v1094
        %v1096 = vand.u32 %v643, 4294901760
        %1097 = vmatmul.mubr.f32.gmra.mrb[0].mxu0 %v1096
        %v1098 = vpop.f32.mrb[0].mxu0
        %v1099 = vadd.f32 %v822, %v1098
        %v1100 = vpop.f32.mrb[0].mxu0
        %v1101 = vadd.f32 %v824, %v1100
        %v1102 = vand.u32 %v691, 4294901760
        %1103 = vmatprep.mubr.f32.mxu0 %v1102
        %v1104 = vand.u32 %v645, 4294901760
        %1105 = vmatmul.mubr.f32.gmra.mrb[0].mxu0 %v1104
        %v1106 = vpop.f32.mrb[0].mxu0
        %v1107 = vadd.f32 %v838, %v1106
        %v1108 = vpop.f32.mrb[0].mxu0
        %v1109 = vadd.f32 %v840, %v1108
        %1110 = vdwg.mxu0
        %v1111 = vand.u32 %v648, 4294901760
        %v1112 = vsub.f32 %v648, %v1111
        %1113 = vmatprep.subr.mxu0 %v1112
        %v1114 = vand.u32 %v647, 4294901760
        %v1115 = vsub.f32 %v647, %v1114
        %1116 = vmatpush1.msra.mxu0 %v1115
        %v1117 = vand.u32 %v650, 4294901760
        %v1118 = vsub.f32 %v650, %v1117
        %1119 = vmatprep.subr.mxu0 %v1118
        %v1120 = vand.u32 %v649, 4294901760
        %v1121 = vsub.f32 %v649, %v1120
        %1122 = vmatpush1.msra.mxu0 %v1121
        %v1123 = vand.u32 %v652, 4294901760
        %v1124 = vsub.f32 %v652, %v1123
        %1125 = vmatprep.subr.mxu0 %v1124
        %v1126 = vand.u32 %v651, 4294901760
        %v1127 = vsub.f32 %v651, %v1126
        %1128 = vmatpush1.msra.mxu0 %v1127
        %v1129 = vand.u32 %v654, 4294901760
        %v1130 = vsub.f32 %v654, %v1129
        %1131 = vmatprep.subr.mxu0 %v1130
        %v1132 = vand.u32 %v653, 4294901760
        %v1133 = vsub.f32 %v653, %v1132
        %1134 = vmatpush1.msra.mxu0 %v1133
        %v1135 = vand.u32 %v656, 4294901760
        %v1136 = vsub.f32 %v656, %v1135
        %1137 = vmatprep.subr.mxu0 %v1136
        %v1138 = vand.u32 %v655, 4294901760
        %v1139 = vsub.f32 %v655, %v1138
        %1140 = vmatpush1.msra.mxu0 %v1139
        %v1141 = vand.u32 %v658, 4294901760
        %v1142 = vsub.f32 %v658, %v1141
        %1143 = vmatprep.subr.mxu0 %v1142
        %v1144 = vand.u32 %v657, 4294901760
        %v1145 = vsub.f32 %v657, %v1144
        %1146 = vmatpush1.msra.mxu0 %v1145
        %v1147 = vand.u32 %v660, 4294901760
        %v1148 = vsub.f32 %v660, %v1147
        %1149 = vmatprep.subr.mxu0 %v1148
        %v1150 = vand.u32 %v659, 4294901760
        %v1151 = vsub.f32 %v659, %v1150
        %1152 = vmatpush1.msra.mxu0 %v1151
        %v1153 = vand.u32 %v662, 4294901760
        %v1154 = vsub.f32 %v662, %v1153
        %1155 = vmatprep.subr.mxu0 %v1154
        %v1156 = vand.u32 %v661, 4294901760
        %v1157 = vsub.f32 %v661, %v1156
        %1158 = vmatpush1.msra.mxu0 %v1157
        %v1159 = vand.u32 %v664, 4294901760
        %v1160 = vsub.f32 %v664, %v1159
        %1161 = vmatprep.subr.mxu0 %v1160
        %v1162 = vand.u32 %v663, 4294901760
        %v1163 = vsub.f32 %v663, %v1162
        %1164 = vmatpush1.msra.mxu0 %v1163
        %v1165 = vand.u32 %v666, 4294901760
        %v1166 = vsub.f32 %v666, %v1165
        %1167 = vmatprep.subr.mxu0 %v1166
        %v1168 = vand.u32 %v665, 4294901760
        %v1169 = vsub.f32 %v665, %v1168
        %1170 = vmatpush1.msra.mxu0 %v1169
        %v1171 = vand.u32 %v668, 4294901760
        %v1172 = vsub.f32 %v668, %v1171
        %1173 = vmatprep.subr.mxu0 %v1172
        %v1174 = vand.u32 %v667, 4294901760
        %v1175 = vsub.f32 %v667, %v1174
        %1176 = vmatpush1.msra.mxu0 %v1175
        %v1177 = vand.u32 %v670, 4294901760
        %v1178 = vsub.f32 %v670, %v1177
        %1179 = vmatprep.subr.mxu0 %v1178
        %v1180 = vand.u32 %v669, 4294901760
        %v1181 = vsub.f32 %v669, %v1180
        %1182 = vmatpush1.msra.mxu0 %v1181
        %v1183 = vand.u32 %v672, 4294901760
        %v1184 = vsub.f32 %v672, %v1183
        %1185 = vmatprep.subr.mxu0 %v1184
        %v1186 = vand.u32 %v671, 4294901760
        %v1187 = vsub.f32 %v671, %v1186
        %1188 = vmatpush1.msra.mxu0 %v1187
        %v1189 = vand.u32 %v674, 4294901760
        %v1190 = vsub.f32 %v674, %v1189
        %1191 = vmatprep.subr.mxu0 %v1190
        %v1192 = vand.u32 %v673, 4294901760
        %v1193 = vsub.f32 %v673, %v1192
        %1194 = vmatpush1.msra.mxu0 %v1193
        %v1195 = vand.u32 %v676, 4294901760
        %v1196 = vsub.f32 %v676, %v1195
        %1197 = vmatprep.subr.mxu0 %v1196
        %v1198 = vand.u32 %v675, 4294901760
        %v1199 = vsub.f32 %v675, %v1198
        %1200 = vmatpush1.msra.mxu0 %v1199
        %v1201 = vand.u32 %v678, 4294901760
        %v1202 = vsub.f32 %v678, %v1201
        %1203 = vmatprep.subr.mxu0 %v1202
        %v1204 = vand.u32 %v677, 4294901760
        %v1205 = vsub.f32 %v677, %v1204
        %1206 = vmatpush1.msra.mxu0 %v1205
        %v1207 = vand.u32 %v680, 4294901760
        %v1208 = vsub.f32 %v680, %v1207
        %1209 = vmatprep.subr.mxu0 %v1208
        %v1210 = vand.u32 %v679, 4294901760
        %v1211 = vsub.f32 %v679, %v1210
        %1212 = vmatpush1.msra.mxu0 %v1211
        %v1213 = vand.u32 %v682, 4294901760
        %v1214 = vsub.f32 %v682, %v1213
        %1215 = vmatprep.subr.mxu0 %v1214
        %v1216 = vand.u32 %v681, 4294901760
        %v1217 = vsub.f32 %v681, %v1216
        %1218 = vmatpush1.msra.mxu0 %v1217
        %1219 = vmatprep.subr.mxu0 0.0
        %1220 = vmatpush1.msra.mxu0 0.0
        %1221 = vmatprep.subr.mxu0 0.0
        %1222 = vmatpush1.msra.mxu0 0.0
        %1223 = vmatprep.subr.mxu0 0.0
        %1224 = vmatpush1.msra.mxu0 0.0
        %1225 = vmatprep.subr.mxu0 0.0
        %1226 = vmatpush1.msra.mxu0 0.0
        %1227 = vmatprep.subr.mxu0 0.0
        %1228 = vmatpush1.msra.mxu0 0.0
        %1229 = vmatprep.subr.mxu0 0.0
        %1230 = vmatpush1.msra.mxu0 0.0
        %1231 = vmatprep.subr.mxu0 0.0
        %1232 = vmatpush1.msra.mxu0 0.0
        %1233 = vmatprep.subr.mxu0 0.0
        %1234 = vmatpush1.msra.mxu0 0.0
        %1235 = vmatprep.subr.mxu0 0.0
        %1236 = vmatpush1.msra.mxu0 0.0
        %1237 = vmatprep.subr.mxu0 0.0
        %1238 = vmatpush1.msra.mxu0 0.0
        %1239 = vmatprep.subr.mxu0 0.0
        %1240 = vmatpush1.msra.mxu0 0.0
        %1241 = vmatprep.subr.mxu0 0.0
        %1242 = vmatpush1.msra.mxu0 0.0
        %1243 = vmatprep.subr.mxu0 0.0
        %1244 = vmatpush1.msra.mxu0 0.0
        %1245 = vmatprep.subr.mxu0 0.0
        %1246 = vmatpush1.msra.mxu0 0.0
        %v1247 = vand.u32 %v685, 4294901760
        %v1248 = vsub.f32 %v685, %v1247
        %1249 = vmatprep.mubr.f32.mxu0 %v1248
        %v1250 = vand.u32 %v641, 4294901760
        %v1251 = vsub.f32 %v641, %v1250
        %1252 = vmatmul.mubr.f32.gmra.mrb[0].mxu0 %v1251
        %v1253 = vpop.f32.mrb[0].mxu0
        %v1254 = vadd.f32 %v1091, %v1253
        %v1255 = vpop.f32.mrb[0].mxu0
        %v1256 = vadd.f32 %v1093, %v1255
        %v1257 = vand.u32 %v688, 4294901760
        %v1258 = vsub.f32 %v688, %v1257
        %1259 = vmatprep.mubr.f32.mxu0 %v1258
        %v1260 = vand.u32 %v643, 4294901760
        %v1261 = vsub.f32 %v643, %v1260
        %1262 = vmatmul.mubr.f32.gmra.mrb[0].mxu0 %v1261
        %v1263 = vpop.f32.mrb[0].mxu0
        %v1264 = vadd.f32 %v1099, %v1263
        %v1265 = vpop.f32.mrb[0].mxu0
        %v1266 = vadd.f32 %v1101, %v1265
        %v1267 = vand.u32 %v691, 4294901760
        %v1268 = vsub.f32 %v691, %v1267
        %1269 = vmatprep.mubr.f32.mxu0 %v1268
        %v1270 = vand.u32 %v645, 4294901760
        %v1271 = vsub.f32 %v645, %v1270
        %1272 = vmatmul.mubr.f32.gmra.mrb[0].mxu0 %v1271
        %v1273 = vpop.f32.mrb[0].mxu0
        %v1274 = vadd.f32 %v1107, %v1273
        %v1275 = vpop.f32.mrb[0].mxu0
        %v1276 = vadd.f32 %v1109, %v1275
        %1277 = vdwg.mxu0
        %v1278 = vand.u32 %v648, 4294901760
        %1279 = vmatprep.subr.mxu0 %v1278
        %v1280 = vand.u32 %v647, 4294901760
        %1281 = vmatpush1.msra.mxu0 %v1280
        %v1282 = vand.u32 %v650, 4294901760
        %1283 = vmatprep.subr.mxu0 %v1282
        %v1284 = vand.u32 %v649, 4294901760
        %1285 = vmatpush1.msra.mxu0 %v1284
        %v1286 = vand.u32 %v652, 4294901760
        %1287 = vmatprep.subr.mxu0 %v1286
        %v1288 = vand.u32 %v651, 4294901760
        %1289 = vmatpush1.msra.mxu0 %v1288
        %v1290 = vand.u32 %v654, 4294901760
        %1291 = vmatprep.subr.mxu0 %v1290
        %v1292 = vand.u32 %v653, 4294901760
        %1293 = vmatpush1.msra.mxu0 %v1292
        %v1294 = vand.u32 %v656, 4294901760
        %1295 = vmatprep.subr.mxu0 %v1294
        %v1296 = vand.u32 %v655, 4294901760
        %1297 = vmatpush1.msra.mxu0 %v1296
        %v1298 = vand.u32 %v658, 4294901760
        %1299 = vmatprep.subr.mxu0 %v1298
        %v1300 = vand.u32 %v657, 4294901760
        %1301 = vmatpush1.msra.mxu0 %v1300
        %v1302 = vand.u32 %v660, 4294901760
        %1303 = vmatprep.subr.mxu0 %v1302
        %v1304 = vand.u32 %v659, 4294901760
        %1305 = vmatpush1.msra.mxu0 %v1304
        %v1306 = vand.u32 %v662, 4294901760
        %1307 = vmatprep.subr.mxu0 %v1306
        %v1308 = vand.u32 %v661, 4294901760
        %1309 = vmatpush1.msra.mxu0 %v1308
        %v1310 = vand.u32 %v664, 4294901760
        %1311 = vmatprep.subr.mxu0 %v1310
        %v1312 = vand.u32 %v663, 4294901760
        %1313 = vmatpush1.msra.mxu0 %v1312
        %v1314 = vand.u32 %v666, 4294901760
        %1315 = vmatprep.subr.mxu0 %v1314
        %v1316 = vand.u32 %v665, 4294901760
        %1317 = vmatpush1.msra.mxu0 %v1316
        %v1318 = vand.u32 %v668, 4294901760
        %1319 = vmatprep.subr.mxu0 %v1318
        %v1320 = vand.u32 %v667, 4294901760
        %1321 = vmatpush1.msra.mxu0 %v1320
        %v1322 = vand.u32 %v670, 4294901760
        %1323 = vmatprep.subr.mxu0 %v1322
        %v1324 = vand.u32 %v669, 4294901760
        %1325 = vmatpush1.msra.mxu0 %v1324
        %v1326 = vand.u32 %v672, 4294901760
        %1327 = vmatprep.subr.mxu0 %v1326
        %v1328 = vand.u32 %v671, 4294901760
        %1329 = vmatpush1.msra.mxu0 %v1328
        %v1330 = vand.u32 %v674, 4294901760
        %1331 = vmatprep.subr.mxu0 %v1330
        %v1332 = vand.u32 %v673, 4294901760
        %1333 = vmatpush1.msra.mxu0 %v1332
        %v1334 = vand.u32 %v676, 4294901760
        %1335 = vmatprep.subr.mxu0 %v1334
        %v1336 = vand.u32 %v675, 4294901760
        %1337 = vmatpush1.msra.mxu0 %v1336
        %v1338 = vand.u32 %v678, 4294901760
        %1339 = vmatprep.subr.mxu0 %v1338
        %v1340 = vand.u32 %v677, 4294901760
        %1341 = vmatpush1.msra.mxu0 %v1340
        %v1342 = vand.u32 %v680, 4294901760
        %1343 = vmatprep.subr.mxu0 %v1342
        %v1344 = vand.u32 %v679, 4294901760
        %1345 = vmatpush1.msra.mxu0 %v1344
        %v1346 = vand.u32 %v682, 4294901760
        %1347 = vmatprep.subr.mxu0 %v1346
        %v1348 = vand.u32 %v681, 4294901760
        %1349 = vmatpush1.msra.mxu0 %v1348
        %1350 = vmatprep.subr.mxu0 0.0
        %1351 = vmatpush1.msra.mxu0 0.0
        %1352 = vmatprep.subr.mxu0 0.0
        %1353 = vmatpush1.msra.mxu0 0.0
        %1354 = vmatprep.subr.mxu0 0.0
        %1355 = vmatpush1.msra.mxu0 0.0
        %1356 = vmatprep.subr.mxu0 0.0
        %1357 = vmatpush1.msra.mxu0 0.0
        %1358 = vmatprep.subr.mxu0 0.0
        %1359 = vmatpush1.msra.mxu0 0.0
        %1360 = vmatprep.subr.mxu0 0.0
        %1361 = vmatpush1.msra.mxu0 0.0
        %1362 = vmatprep.subr.mxu0 0.0
        %1363 = vmatpush1.msra.mxu0 0.0
        %1364 = vmatprep.subr.mxu0 0.0
        %1365 = vmatpush1.msra.mxu0 0.0
        %1366 = vmatprep.subr.mxu0 0.0
        %1367 = vmatpush1.msra.mxu0 0.0
        %1368 = vmatprep.subr.mxu0 0.0
        %1369 = vmatpush1.msra.mxu0 0.0
        %1370 = vmatprep.subr.mxu0 0.0
        %1371 = vmatpush1.msra.mxu0 0.0
        %1372 = vmatprep.subr.mxu0 0.0
        %1373 = vmatpush1.msra.mxu0 0.0
        %1374 = vmatprep.subr.mxu0 0.0
        %1375 = vmatpush1.msra.mxu0 0.0
        %1376 = vmatprep.subr.mxu0 0.0
        %1377 = vmatpush1.msra.mxu0 0.0
        %v1378 = vand.u32 %v685, 4294901760
        %v1379 = vsub.f32 %v685, %v1378
        %v1380 = vand.u32 %v1379, 4294901760
        %1381 = vmatprep.mubr.f32.mxu0 %v1380
        %v1382 = vand.u32 %v641, 4294901760
        %v1383 = vsub.f32 %v641, %v1382
        %v1384 = vand.u32 %v1383, 4294901760
        %1385 = vmatmul.mubr.f32.gmra.mrb[0].mxu0 %v1384
        %v1386 = vpop.f32.mrb[0].mxu0
        %v1387 = vadd.f32 %v1254, %v1386
        %v1388 = vpop.f32.mrb[0].mxu0
        %v1389 = vadd.f32 %v1256, %v1388
        %v1390 = vand.u32 %v688, 4294901760
        %v1391 = vsub.f32 %v688, %v1390
        %v1392 = vand.u32 %v1391, 4294901760
        %1393 = vmatprep.mubr.f32.mxu0 %v1392
        %v1394 = vand.u32 %v643, 4294901760
        %v1395 = vsub.f32 %v643, %v1394
        %v1396 = vand.u32 %v1395, 4294901760
        %1397 = vmatmul.mubr.f32.gmra.mrb[0].mxu0 %v1396
        %v1398 = vpop.f32.mrb[0].mxu0
        %v1399 = vadd.f32 %v1264, %v1398
        %v1400 = vpop.f32.mrb[0].mxu0
        %v1401 = vadd.f32 %v1266, %v1400
        %v1402 = vand.u32 %v691, 4294901760
        %v1403 = vsub.f32 %v691, %v1402
        %v1404 = vand.u32 %v1403, 4294901760
        %1405 = vmatprep.mubr.f32.mxu0 %v1404
        %v1406 = vand.u32 %v645, 4294901760
        %v1407 = vsub.f32 %v645, %v1406
        %v1408 = vand.u32 %v1407, 4294901760
        %1409 = vmatmul.mubr.f32.gmra.mrb[0].mxu0 %v1408
        %v1410 = vpop.f32.mrb[0].mxu0
        %v1411 = vadd.f32 %v1274, %v1410
        %v1412 = vpop.f32.mrb[0].mxu0
        %v1413 = vadd.f32 %v1276, %v1412
        %1414 = vdwg.mxu0
        %v1415 = vand.u32 %v648, 4294901760
        %v1416 = vsub.f32 %v648, %v1415
        %v1417 = vand.u32 %v1416, 4294901760
        %1418 = vmatprep.subr.mxu0 %v1417
        %v1419 = vand.u32 %v647, 4294901760
        %v1420 = vsub.f32 %v647, %v1419
        %v1421 = vand.u32 %v1420, 4294901760
        %1422 = vmatpush1.msra.mxu0 %v1421
        %v1423 = vand.u32 %v650, 4294901760
        %v1424 = vsub.f32 %v650, %v1423
        %v1425 = vand.u32 %v1424, 4294901760
        %1426 = vmatprep.subr.mxu0 %v1425
        %v1427 = vand.u32 %v649, 4294901760
        %v1428 = vsub.f32 %v649, %v1427
        %v1429 = vand.u32 %v1428, 4294901760
        %1430 = vmatpush1.msra.mxu0 %v1429
        %v1431 = vand.u32 %v652, 4294901760
        %v1432 = vsub.f32 %v652, %v1431
        %v1433 = vand.u32 %v1432, 4294901760
        %1434 = vmatprep.subr.mxu0 %v1433
        %v1435 = vand.u32 %v651, 4294901760
        %v1436 = vsub.f32 %v651, %v1435
        %v1437 = vand.u32 %v1436, 4294901760
        %1438 = vmatpush1.msra.mxu0 %v1437
        %v1439 = vand.u32 %v654, 4294901760
        %v1440 = vsub.f32 %v654, %v1439
        %v1441 = vand.u32 %v1440, 4294901760
        %1442 = vmatprep.subr.mxu0 %v1441
        %v1443 = vand.u32 %v653, 4294901760
        %v1444 = vsub.f32 %v653, %v1443
        %v1445 = vand.u32 %v1444, 4294901760
        %1446 = vmatpush1.msra.mxu0 %v1445
        %v1447 = vand.u32 %v656, 4294901760
        %v1448 = vsub.f32 %v656, %v1447
        %v1449 = vand.u32 %v1448, 4294901760
        %1450 = vmatprep.subr.mxu0 %v1449
        %v1451 = vand.u32 %v655, 4294901760
        %v1452 = vsub.f32 %v655, %v1451
        %v1453 = vand.u32 %v1452, 4294901760
        %1454 = vmatpush1.msra.mxu0 %v1453
        %v1455 = vand.u32 %v658, 4294901760
        %v1456 = vsub.f32 %v658, %v1455
        %v1457 = vand.u32 %v1456, 4294901760
        %1458 = vmatprep.subr.mxu0 %v1457
        %v1459 = vand.u32 %v657, 4294901760
        %v1460 = vsub.f32 %v657, %v1459
        %v1461 = vand.u32 %v1460, 4294901760
        %1462 = vmatpush1.msra.mxu0 %v1461
        %v1463 = vand.u32 %v660, 4294901760
        %v1464 = vsub.f32 %v660, %v1463
        %v1465 = vand.u32 %v1464, 4294901760
        %1466 = vmatprep.subr.mxu0 %v1465
        %v1467 = vand.u32 %v659, 4294901760
        %v1468 = vsub.f32 %v659, %v1467
        %v1469 = vand.u32 %v1468, 4294901760
        %1470 = vmatpush1.msra.mxu0 %v1469
        %v1471 = vand.u32 %v662, 4294901760
        %v1472 = vsub.f32 %v662, %v1471
        %v1473 = vand.u32 %v1472, 4294901760
        %1474 = vmatprep.subr.mxu0 %v1473
        %v1475 = vand.u32 %v661, 4294901760
        %v1476 = vsub.f32 %v661, %v1475
        %v1477 = vand.u32 %v1476, 4294901760
        %1478 = vmatpush1.msra.mxu0 %v1477
        %v1479 = vand.u32 %v664, 4294901760
        %v1480 = vsub.f32 %v664, %v1479
        %v1481 = vand.u32 %v1480, 4294901760
        %1482 = vmatprep.subr.mxu0 %v1481
        %v1483 = vand.u32 %v663, 4294901760
        %v1484 = vsub.f32 %v663, %v1483
        %v1485 = vand.u32 %v1484, 4294901760
        %1486 = vmatpush1.msra.mxu0 %v1485
        %v1487 = vand.u32 %v666, 4294901760
        %v1488 = vsub.f32 %v666, %v1487
        %v1489 = vand.u32 %v1488, 4294901760
        %1490 = vmatprep.subr.mxu0 %v1489
        %v1491 = vand.u32 %v665, 4294901760
        %v1492 = vsub.f32 %v665, %v1491
        %v1493 = vand.u32 %v1492, 4294901760
        %1494 = vmatpush1.msra.mxu0 %v1493
        %v1495 = vand.u32 %v668, 4294901760
        %v1496 = vsub.f32 %v668, %v1495
        %v1497 = vand.u32 %v1496, 4294901760
        %1498 = vmatprep.subr.mxu0 %v1497
        %v1499 = vand.u32 %v667, 4294901760
        %v1500 = vsub.f32 %v667, %v1499
        %v1501 = vand.u32 %v1500, 4294901760
        %1502 = vmatpush1.msra.mxu0 %v1501
        %v1503 = vand.u32 %v670, 4294901760
        %v1504 = vsub.f32 %v670, %v1503
        %v1505 = vand.u32 %v1504, 4294901760
        %1506 = vmatprep.subr.mxu0 %v1505
        %v1507 = vand.u32 %v669, 4294901760
        %v1508 = vsub.f32 %v669, %v1507
        %v1509 = vand.u32 %v1508, 4294901760
        %1510 = vmatpush1.msra.mxu0 %v1509
        %v1511 = vand.u32 %v672, 4294901760
        %v1512 = vsub.f32 %v672, %v1511
        %v1513 = vand.u32 %v1512, 4294901760
        %1514 = vmatprep.subr.mxu0 %v1513
        %v1515 = vand.u32 %v671, 4294901760
        %v1516 = vsub.f32 %v671, %v1515
        %v1517 = vand.u32 %v1516, 4294901760
        %1518 = vmatpush1.msra.mxu0 %v1517
        %v1519 = vand.u32 %v674, 4294901760
        %v1520 = vsub.f32 %v674, %v1519
        %v1521 = vand.u32 %v1520, 4294901760
        %1522 = vmatprep.subr.mxu0 %v1521
        %v1523 = vand.u32 %v673, 4294901760
        %v1524 = vsub.f32 %v673, %v1523
        %v1525 = vand.u32 %v1524, 4294901760
        %1526 = vmatpush1.msra.mxu0 %v1525
        %v1527 = vand.u32 %v676, 4294901760
        %v1528 = vsub.f32 %v676, %v1527
        %v1529 = vand.u32 %v1528, 4294901760
        %1530 = vmatprep.subr.mxu0 %v1529
        %v1531 = vand.u32 %v675, 4294901760
        %v1532 = vsub.f32 %v675, %v1531
        %v1533 = vand.u32 %v1532, 4294901760
        %1534 = vmatpush1.msra.mxu0 %v1533
        %v1535 = vand.u32 %v678, 4294901760
        %v1536 = vsub.f32 %v678, %v1535
        %v1537 = vand.u32 %v1536, 4294901760
        %1538 = vmatprep.subr.mxu0 %v1537
        %v1539 = vand.u32 %v677, 4294901760
        %v1540 = vsub.f32 %v677, %v1539
        %v1541 = vand.u32 %v1540, 4294901760
        %1542 = vmatpush1.msra.mxu0 %v1541
        %v1543 = vand.u32 %v680, 4294901760
        %v1544 = vsub.f32 %v680, %v1543
        %v1545 = vand.u32 %v1544, 4294901760
        %1546 = vmatprep.subr.mxu0 %v1545
        %v1547 = vand.u32 %v679, 4294901760
        %v1548 = vsub.f32 %v679, %v1547
        %v1549 = vand.u32 %v1548, 4294901760
        %1550 = vmatpush1.msra.mxu0 %v1549
        %v1551 = vand.u32 %v682, 4294901760
        %v1552 = vsub.f32 %v682, %v1551
        %v1553 = vand.u32 %v1552, 4294901760
        %1554 = vmatprep.subr.mxu0 %v1553
        %v1555 = vand.u32 %v681, 4294901760
        %v1556 = vsub.f32 %v681, %v1555
        %v1557 = vand.u32 %v1556, 4294901760
        %1558 = vmatpush1.msra.mxu0 %v1557
        %1559 = vmatprep.subr.mxu0 0.0
        %1560 = vmatpush1.msra.mxu0 0.0
        %1561 = vmatprep.subr.mxu0 0.0
        %1562 = vmatpush1.msra.mxu0 0.0
        %1563 = vmatprep.subr.mxu0 0.0
        %1564 = vmatpush1.msra.mxu0 0.0
        %1565 = vmatprep.subr.mxu0 0.0
        %1566 = vmatpush1.msra.mxu0 0.0
        %1567 = vmatprep.subr.mxu0 0.0
        %1568 = vmatpush1.msra.mxu0 0.0
        %1569 = vmatprep.subr.mxu0 0.0
        %1570 = vmatpush1.msra.mxu0 0.0
        %1571 = vmatprep.subr.mxu0 0.0
        %1572 = vmatpush1.msra.mxu0 0.0
        %1573 = vmatprep.subr.mxu0 0.0
        %1574 = vmatpush1.msra.mxu0 0.0
        %1575 = vmatprep.subr.mxu0 0.0
        %1576 = vmatpush1.msra.mxu0 0.0
        %1577 = vmatprep.subr.mxu0 0.0
        %1578 = vmatpush1.msra.mxu0 0.0
        %1579 = vmatprep.subr.mxu0 0.0
        %1580 = vmatpush1.msra.mxu0 0.0
        %1581 = vmatprep.subr.mxu0 0.0
        %1582 = vmatpush1.msra.mxu0 0.0
        %1583 = vmatprep.subr.mxu0 0.0
        %1584 = vmatpush1.msra.mxu0 0.0
        %1585 = vmatprep.subr.mxu0 0.0
        %1586 = vmatpush1.msra.mxu0 0.0
        %v1587 = vand.u32 %v685, 4294901760
        %1588 = vmatprep.mubr.f32.mxu0 %v1587
        %v1589 = vand.u32 %v641, 4294901760
        %1590 = vmatmul.mubr.f32.gmra.mrb[0].mxu0 %v1589
        %v1591 = vpop.f32.mrb[0].mxu0
        %v1592 = vadd.f32 %v1387, %v1591
        %v1593 = vpop.f32.mrb[0].mxu0
        %v1594 = vadd.f32 %v1389, %v1593
        %v1595 = vand.u32 %v688, 4294901760
        %1596 = vmatprep.mubr.f32.mxu0 %v1595
        %v1597 = vand.u32 %v643, 4294901760
        %1598 = vmatmul.mubr.f32.gmra.mrb[0].mxu0 %v1597
        %v1599 = vpop.f32.mrb[0].mxu0
        %v1600 = vadd.f32 %v1399, %v1599
        %v1601 = vpop.f32.mrb[0].mxu0
        %v1602 = vadd.f32 %v1401, %v1601
        %v1603 = vand.u32 %v691, 4294901760
        %1604 = vmatprep.mubr.f32.mxu0 %v1603
        %v1605 = vand.u32 %v645, 4294901760
        %1606 = vmatmul.mubr.f32.gmra.mrb[0].mxu0 %v1605
        %v1607 = vpop.f32.mrb[0].mxu0
        %v1608 = vadd.f32 %v1411, %v1607
        %v1609 = vpop.f32.mrb[0].mxu0
        %v1610 = vadd.f32 %v1413, %v1609
        %1611 = vdwg.mxu0
        %v1612 = vand.u32 %v648, 4294901760
        %1613 = vmatprep.subr.mxu0 %v1612
        %v1614 = vand.u32 %v647, 4294901760
        %1615 = vmatpush1.msra.mxu0 %v1614
        %v1616 = vand.u32 %v650, 4294901760
        %1617 = vmatprep.subr.mxu0 %v1616
        %v1618 = vand.u32 %v649, 4294901760
        %1619 = vmatpush1.msra.mxu0 %v1618
        %v1620 = vand.u32 %v652, 4294901760
        %1621 = vmatprep.subr.mxu0 %v1620
        %v1622 = vand.u32 %v651, 4294901760
        %1623 = vmatpush1.msra.mxu0 %v1622
        %v1624 = vand.u32 %v654, 4294901760
        %1625 = vmatprep.subr.mxu0 %v1624
        %v1626 = vand.u32 %v653, 4294901760
        %1627 = vmatpush1.msra.mxu0 %v1626
        %v1628 = vand.u32 %v656, 4294901760
        %1629 = vmatprep.subr.mxu0 %v1628
        %v1630 = vand.u32 %v655, 4294901760
        %1631 = vmatpush1.msra.mxu0 %v1630
        %v1632 = vand.u32 %v658, 4294901760
        %1633 = vmatprep.subr.mxu0 %v1632
        %v1634 = vand.u32 %v657, 4294901760
        %1635 = vmatpush1.msra.mxu0 %v1634
        %v1636 = vand.u32 %v660, 4294901760
        %1637 = vmatprep.subr.mxu0 %v1636
        %v1638 = vand.u32 %v659, 4294901760
        %1639 = vmatpush1.msra.mxu0 %v1638
        %v1640 = vand.u32 %v662, 4294901760
        %1641 = vmatprep.subr.mxu0 %v1640
        %v1642 = vand.u32 %v661, 4294901760
        %1643 = vmatpush1.msra.mxu0 %v1642
        %v1644 = vand.u32 %v664, 4294901760
        %1645 = vmatprep.subr.mxu0 %v1644
        %v1646 = vand.u32 %v663, 4294901760
        %1647 = vmatpush1.msra.mxu0 %v1646
        %v1648 = vand.u32 %v666, 4294901760
        %1649 = vmatprep.subr.mxu0 %v1648
        %v1650 = vand.u32 %v665, 4294901760
        %1651 = vmatpush1.msra.mxu0 %v1650
        %v1652 = vand.u32 %v668, 4294901760
        %1653 = vmatprep.subr.mxu0 %v1652
        %v1654 = vand.u32 %v667, 4294901760
        %1655 = vmatpush1.msra.mxu0 %v1654
        %v1656 = vand.u32 %v670, 4294901760
        %1657 = vmatprep.subr.mxu0 %v1656
        %v1658 = vand.u32 %v669, 4294901760
        %1659 = vmatpush1.msra.mxu0 %v1658
        %v1660 = vand.u32 %v672, 4294901760
        %1661 = vmatprep.subr.mxu0 %v1660
        %v1662 = vand.u32 %v671, 4294901760
        %1663 = vmatpush1.msra.mxu0 %v1662
        %v1664 = vand.u32 %v674, 4294901760
        %1665 = vmatprep.subr.mxu0 %v1664
        %v1666 = vand.u32 %v673, 4294901760
        %1667 = vmatpush1.msra.mxu0 %v1666
        %v1668 = vand.u32 %v676, 4294901760
        %1669 = vmatprep.subr.mxu0 %v1668
        %v1670 = vand.u32 %v675, 4294901760
        %1671 = vmatpush1.msra.mxu0 %v1670
        %v1672 = vand.u32 %v678, 4294901760
        %1673 = vmatprep.subr.mxu0 %v1672
        %v1674 = vand.u32 %v677, 4294901760
        %1675 = vmatpush1.msra.mxu0 %v1674
        %v1676 = vand.u32 %v680, 4294901760
        %1677 = vmatprep.subr.mxu0 %v1676
        %v1678 = vand.u32 %v679, 4294901760
        %1679 = vmatpush1.msra.mxu0 %v1678
        %v1680 = vand.u32 %v682, 4294901760
        %1681 = vmatprep.subr.mxu0 %v1680
        %v1682 = vand.u32 %v681, 4294901760
        %1683 = vmatpush1.msra.mxu0 %v1682
        %1684 = vmatprep.subr.mxu0 0.0
        %1685 = vmatpush1.msra.mxu0 0.0
        %1686 = vmatprep.subr.mxu0 0.0
        %1687 = vmatpush1.msra.mxu0 0.0
        %1688 = vmatprep.subr.mxu0 0.0
        %1689 = vmatpush1.msra.mxu0 0.0
        %1690 = vmatprep.subr.mxu0 0.0
        %1691 = vmatpush1.msra.mxu0 0.0
        %1692 = vmatprep.subr.mxu0 0.0
        %1693 = vmatpush1.msra.mxu0 0.0
        %1694 = vmatprep.subr.mxu0 0.0
        %1695 = vmatpush1.msra.mxu0 0.0
        %1696 = vmatprep.subr.mxu0 0.0
        %1697 = vmatpush1.msra.mxu0 0.0
        %1698 = vmatprep.subr.mxu0 0.0
        %1699 = vmatpush1.msra.mxu0 0.0
        %1700 = vmatprep.subr.mxu0 0.0
        %1701 = vmatpush1.msra.mxu0 0.0
        %1702 = vmatprep.subr.mxu0 0.0
        %1703 = vmatpush1.msra.mxu0 0.0
        %1704 = vmatprep.subr.mxu0 0.0
        %1705 = vmatpush1.msra.mxu0 0.0
        %1706 = vmatprep.subr.mxu0 0.0
        %1707 = vmatpush1.msra.mxu0 0.0
        %1708 = vmatprep.subr.mxu0 0.0
        %1709 = vmatpush1.msra.mxu0 0.0
        %1710 = vmatprep.subr.mxu0 0.0
        %1711 = vmatpush1.msra.mxu0 0.0
        %v1712 = vand.u32 %v685, 4294901760
        %1713 = vmatprep.mubr.f32.mxu0 %v1712
        %v1714 = vand.u32 %v641, 4294901760
        %1715 = vmatmul.mubr.f32.gmra.mrb[0].mxu0 %v1714
        %v1716 = vpop.f32.mrb[0].mxu0
        %v1717 = vadd.f32 %v1592, %v1716
        %v1718 = vpop.f32.mrb[0].mxu0
        %v1719 = vadd.f32 %v1594, %v1718
        %v1720 = vand.u32 %v688, 4294901760
        %1721 = vmatprep.mubr.f32.mxu0 %v1720
        %v1722 = vand.u32 %v643, 4294901760
        %1723 = vmatmul.mubr.f32.gmra.mrb[0].mxu0 %v1722
        %v1724 = vpop.f32.mrb[0].mxu0
        %v1725 = vadd.f32 %v1600, %v1724
        %v1726 = vpop.f32.mrb[0].mxu0
        %v1727 = vadd.f32 %v1602, %v1726
        %v1728 = vand.u32 %v691, 4294901760
        %1729 = vmatprep.mubr.f32.mxu0 %v1728
        %v1730 = vand.u32 %v645, 4294901760
        %1731 = vmatmul.mubr.f32.gmra.mrb[0].mxu0 %v1730
        %v1732 = vpop.f32.mrb[0].mxu0
        %v1733 = vadd.f32 %v1608, %v1732
        %v1734 = vpop.f32.mrb[0].mxu0
        %v1735 = vadd.f32 %v1610, %v1734
        %1736 = vdwg.mxu0
        %v1737 = vld [vmem:[%s5] sm:$0xff]
        %v1738 = vld [vmem:[%s5 + $0x8] sm:$0xff]
        %1740 = vset.pattern.permute.xlu0 0
        %1741 = vperm.xlu0 %1740, %v1737
        %v1742 = vpop.permute.xlu0 %1741
        %1745 = vset.pattern.permute.xlu0 0
        %1746 = vperm.xlu0 %1745, %v1738
        %v1747 = vpop.permute.xlu0 %1746
        %v1749 = vadd.f32 %v1717, %v1742
        %v1750 = vadd.f32 %v1719, %v1742
        %v1751 = vadd.f32 %v1725, %v1747
        %v1752 = vadd.f32 %v1727, %v1747
        %v1753 = vxor.u32 %v1749, 2147483648
        %v1754 = vxor.u32 %v1750, 2147483648
        %v1755 = vxor.u32 %v1751, 2147483648
        %v1756 = vxor.u32 %v1752, 2147483648
        %v1757 = vmul.f32 %v1753, 1.442695
        %v1758 = vpow.pop %v1757
        %v1759 = vmul.f32 %v1754, 1.442695
        %v1760 = vpow.pop %v1759
        %v1761 = vmul.f32 %v1755, 1.442695
        %v1762 = vpow.pop %v1761
        %v1763 = vmul.f32 %v1756, 1.442695
        %v1764 = vpow.pop %v1763
        %v1765 = vadd.f32 %v1758, 1.0
        %v1766 = vadd.f32 %v1760, 1.0
        %v1767 = vadd.f32 %v1762, 1.0
        %v1768 = vadd.f32 %v1764, 1.0
        %v1769 = vrcp.pop %v1765
        %v1770 = vmul.f32 1.0, %v1769
        %v1771 = vrcp.pop %v1766
        %v1772 = vmul.f32 1.0, %v1771
        %v1773 = vrcp.pop %v1767
        %v1774 = vmul.f32 1.0, %v1773
        %v1775 = vrcp.pop %v1768
        %v1776 = vmul.f32 1.0, %v1775
        %v1777 = vmul.f32 %v1774, %v348
        %v1778 = vmul.f32 %v1776, %v349
        %1779 = vrot.lane.b32.xlu0 %v1777, 17
        %v1780 = vpop.permute.xlu0 %1779
        %1781 = vrot.lane.b32.xlu0 %v1778, 17
        %v1782 = vpop.permute.xlu0 %1781
        %v1783 = vsel %vm374, %v1780, %v1782
        %v1784 = vsel %vm374, %v1782, %v1780
        %v1785 = vld [vmem:[%s2] ss:$8 sm:$0x3]
        %v1787 = vlaneseq
        %v1788 = vshrl.u32 %v1787, 7
        %v1789 = vsub.s32 0, %v1788
        %v1790 = vrot.slane %v1785, %v1789
        %v1791 = vlaneseq
        %v1792 = vshrl.u32 %v1791, 7
        %v1793 = vsub.s32 1, %v1792
        %v1794 = vrot.slane %v1785, %v1793
        %v1797 = vmul.f32 %v1784, %v1790
        %v1798 = vmul.f32 %v1783, %v1794
        %1799 = vst [vmem:[#allocation3] sm:$0xff] %v1797
        %1800 = vst [vmem:[#allocation3 + $0x8] sm:$0xff] %v1798
        %1801 = vrot.lane.b32.xlu0 %v1777, 16
        %v1802 = vpop.permute.xlu0 %1801
        %1803 = vrot.lane.b32.xlu0 %v1778, 16
        %v1804 = vpop.permute.xlu0 %1803
        %v1805 = vsel %vm407, %v1802, %v1804
        %v1806 = vsel %vm407, %v1804, %v1802
        %v1807 = vld [vmem:[%s412] ss:$8 sm:$0x3]
        %v1809 = vlaneseq
        %v1810 = vshrl.u32 %v1809, 7
        %v1811 = vsub.s32 0, %v1810
        %v1812 = vrot.slane %v1807, %v1811
        %v1813 = vlaneseq
        %v1814 = vshrl.u32 %v1813, 7
        %v1815 = vsub.s32 1, %v1814
        %v1816 = vrot.slane %v1807, %v1815
        %v1819 = vmul.f32 %v1806, %v1812
        %v1820 = vmul.f32 %v1805, %v1816
        %1821 = vst [vmem:[#allocation3 + $0x10] sm:$0xff] %v1819
        %1822 = vst [vmem:[#allocation3 + $0x18] sm:$0xff] %v1820
        %1823 = vrot.lane.b32.xlu0 %v1777, 15
        %v1824 = vpop.permute.xlu0 %1823
        %1825 = vrot.lane.b32.xlu0 %v1778, 15
        %v1826 = vpop.permute.xlu0 %1825
        %v1827 = vsel %vm441, %v1824, %v1826
        %v1828 = vsel %vm441, %v1826, %v1824
        %v1829 = vld [vmem:[%s446] ss:$8 sm:$0x3]
        %v1831 = vlaneseq
        %v1832 = vshrl.u32 %v1831, 7
        %v1833 = vsub.s32 0, %v1832
        %v1834 = vrot.slane %v1829, %v1833
        %v1835 = vlaneseq
        %v1836 = vshrl.u32 %v1835, 7
        %v1837 = vsub.s32 1, %v1836
        %v1838 = vrot.slane %v1829, %v1837
        %v1841 = vmul.f32 %v1828, %v1834
        %v1842 = vmul.f32 %v1827, %v1838
        %1843 = vst [vmem:[#allocation3 + $0x20] sm:$0xff] %v1841
        %1844 = vst [vmem:[#allocation3 + $0x28] sm:$0xff] %v1842
        %1845 = vrot.lane.b32.xlu0 %v1777, 1
        %v1846 = vpop.permute.xlu0 %1845
        %1847 = vrot.lane.b32.xlu0 %v1778, 1
        %v1848 = vpop.permute.xlu0 %1847
        %v1849 = vsel %vm475, %v1846, %v1848
        %v1850 = vsel %vm475, %v1848, %v1846
        %v1851 = vld [vmem:[%s480] ss:$8 sm:$0x3]
        %v1853 = vlaneseq
        %v1854 = vshrl.u32 %v1853, 7
        %v1855 = vsub.s32 0, %v1854
        %v1856 = vrot.slane %v1851, %v1855
        %v1857 = vlaneseq
        %v1858 = vshrl.u32 %v1857, 7
        %v1859 = vsub.s32 1, %v1858
        %v1860 = vrot.slane %v1851, %v1859
        %v1863 = vmul.f32 %v1850, %v1856
        %v1864 = vmul.f32 %v1849, %v1860
        %1865 = vst [vmem:[#allocation3 + $0x30] sm:$0xff] %v1863
        %1866 = vst [vmem:[#allocation3 + $0x38] sm:$0xff] %v1864
        %1867 = vst [vmem:[#allocation3 + $0x40] sm:$0xff] %v1777
        %1868 = vst [vmem:[#allocation3 + $0x48] sm:$0xff] %v1778
        %1869 = vrot.lane.b32.xlu0 %v1777, 127
        %v1870 = vpop.permute.xlu0 %1869
        %1871 = vrot.lane.b32.xlu0 %v1778, 127
        %v1872 = vpop.permute.xlu0 %1871
        %v1873 = vsel %vm513, %v1870, %v1872
        %v1874 = vsel %vm513, %v1872, %v1870
        %v1875 = vld [vmem:[%s518] ss:$8 sm:$0x3]
        %v1877 = vlaneseq
        %v1878 = vshrl.u32 %v1877, 7
        %v1879 = vsub.s32 0, %v1878
        %v1880 = vrot.slane %v1875, %v1879
        %v1881 = vlaneseq
        %v1882 = vshrl.u32 %v1881, 7
        %v1883 = vsub.s32 1, %v1882
        %v1884 = vrot.slane %v1875, %v1883
        %v1887 = vmul.f32 %v1873, %v1880
        %v1888 = vmul.f32 %v1874, %v1884
        %1889 = vst [vmem:[#allocation3 + $0x50] sm:$0xff] %v1887
        %1890 = vst [vmem:[#allocation3 + $0x58] sm:$0xff] %v1888
        %1891 = vrot.lane.b32.xlu0 %v1777, 113
        %v1892 = vpop.permute.xlu0 %1891
        %1893 = vrot.lane.b32.xlu0 %v1778, 113
        %v1894 = vpop.permute.xlu0 %1893
        %v1895 = vsel %vm547, %v1892, %v1894
        %v1896 = vsel %vm547, %v1894, %v1892
        %v1897 = vld [vmem:[%s552] ss:$8 sm:$0x3]
        %v1899 = vlaneseq
        %v1900 = vshrl.u32 %v1899, 7
        %v1901 = vsub.s32 0, %v1900
        %v1902 = vrot.slane %v1897, %v1901
        %v1903 = vlaneseq
        %v1904 = vshrl.u32 %v1903, 7
        %v1905 = vsub.s32 1, %v1904
        %v1906 = vrot.slane %v1897, %v1905
        %v1909 = vmul.f32 %v1895, %v1902
        %v1910 = vmul.f32 %v1896, %v1906
        %1911 = vst [vmem:[#allocation3 + $0x60] sm:$0xff] %v1909
        %1912 = vst [vmem:[#allocation3 + $0x68] sm:$0xff] %v1910
        %1913 = vrot.lane.b32.xlu0 %v1777, 112
        %v1914 = vpop.permute.xlu0 %1913
        %1915 = vrot.lane.b32.xlu0 %v1778, 112
        %v1916 = vpop.permute.xlu0 %1915
        %v1917 = vsel %vm581, %v1914, %v1916
        %v1918 = vsel %vm581, %v1916, %v1914
        %v1919 = vld [vmem:[%s586] ss:$8 sm:$0x3]
        %v1921 = vlaneseq
        %v1922 = vshrl.u32 %v1921, 7
        %v1923 = vsub.s32 0, %v1922
        %v1924 = vrot.slane %v1919, %v1923
        %v1925 = vlaneseq
        %v1926 = vshrl.u32 %v1925, 7
        %v1927 = vsub.s32 1, %v1926
        %v1928 = vrot.slane %v1919, %v1927
        %v1931 = vmul.f32 %v1917, %v1924
        %v1932 = vmul.f32 %v1918, %v1928
        %1933 = vst [vmem:[#allocation3 + $0x70] sm:$0xff] %v1931
        %1934 = vst [vmem:[#allocation3 + $0x78] sm:$0xff] %v1932
        %1935 = vrot.lane.b32.xlu0 %v1777, 111
        %v1936 = vpop.permute.xlu0 %1935
        %1937 = vrot.lane.b32.xlu0 %v1778, 111
        %v1938 = vpop.permute.xlu0 %1937
        %v1939 = vsel %vm615, %v1936, %v1938
        %v1940 = vsel %vm615, %v1938, %v1936
        %v1941 = vld [vmem:[%s620] ss:$8 sm:$0x3]
        %v1943 = vlaneseq
        %v1944 = vshrl.u32 %v1943, 7
        %v1945 = vsub.s32 0, %v1944
        %v1946 = vrot.slane %v1941, %v1945
        %v1947 = vlaneseq
        %v1948 = vshrl.u32 %v1947, 7
        %v1949 = vsub.s32 1, %v1948
        %v1950 = vrot.slane %v1941, %v1949
        %v1953 = vmul.f32 %v1939, %v1946
        %v1954 = vmul.f32 %v1940, %v1950
        %1955 = vst [vmem:[#allocation3 + $0x80] sm:$0xff] %v1953
        %1956 = vst [vmem:[#allocation3 + $0x88] sm:$0xff] %v1954
        %v1957 = vld [vmem:[%s4] sm:$0xff]
        %v1958 = vld [vmem:[#allocation3] sm:$0xff]
        %v1959 = vld [vmem:[#allocation3 + $0x8] sm:$0xff]
        %v1960 = vld [vmem:[#allocation3 + $0x10] sm:$0xff]
        %v1961 = vld [vmem:[#allocation3 + $0x18] sm:$0xff]
        %v1962 = vld [vmem:[#allocation3 + $0x20] sm:$0xff]
        %v1963 = vld [vmem:[#allocation3 + $0x28] sm:$0xff]
        %v1964 = vld [vmem:[#allocation3 + $0x30] sm:$0xff]
        %v1965 = vld [vmem:[#allocation3 + $0x38] sm:$0xff]
        %v1966 = vld [vmem:[#allocation3 + $0x40] sm:$0xff]
        %v1967 = vld [vmem:[#allocation3 + $0x48] sm:$0xff]
        %v1968 = vld [vmem:[#allocation3 + $0x50] sm:$0xff]
        %v1969 = vld [vmem:[#allocation3 + $0x58] sm:$0xff]
        %v1970 = vld [vmem:[#allocation3 + $0x60] sm:$0xff]
        %v1971 = vld [vmem:[#allocation3 + $0x68] sm:$0xff]
        %v1972 = vld [vmem:[#allocation3 + $0x70] sm:$0xff]
        %v1973 = vld [vmem:[#allocation3 + $0x78] sm:$0xff]
        %v1974 = vld [vmem:[#allocation3 + $0x80] sm:$0xff]
        %v1975 = vld [vmem:[#allocation3 + $0x88] sm:$0xff]
        %vm1976 = vcmask 588800
        %v1978 = vsel %vm1976, %v1957, 0
        %v1980 = vand.u32 %v1959, 4294901760
        %1981 = vmatprep.subr.mxu0 %v1980
        %v1982 = vand.u32 %v1958, 4294901760
        %1983 = vmatpush1.msra.mxu0 %v1982
        %v1984 = vand.u32 %v1961, 4294901760
        %1985 = vmatprep.subr.mxu0 %v1984
        %v1986 = vand.u32 %v1960, 4294901760
        %1987 = vmatpush1.msra.mxu0 %v1986
        %v1988 = vand.u32 %v1963, 4294901760
        %1989 = vmatprep.subr.mxu0 %v1988
        %v1990 = vand.u32 %v1962, 4294901760
        %1991 = vmatpush1.msra.mxu0 %v1990
        %v1992 = vand.u32 %v1965, 4294901760
        %1993 = vmatprep.subr.mxu0 %v1992
        %v1994 = vand.u32 %v1964, 4294901760
        %1995 = vmatpush1.msra.mxu0 %v1994
        %v1996 = vand.u32 %v1967, 4294901760
        %1997 = vmatprep.subr.mxu0 %v1996
        %v1998 = vand.u32 %v1966, 4294901760
        %1999 = vmatpush1.msra.mxu0 %v1998
        %v2000 = vand.u32 %v1969, 4294901760
        %2001 = vmatprep.subr.mxu0 %v2000
        %v2002 = vand.u32 %v1968, 4294901760
        %2003 = vmatpush1.msra.mxu0 %v2002
        %v2004 = vand.u32 %v1971, 4294901760
        %2005 = vmatprep.subr.mxu0 %v2004
        %v2006 = vand.u32 %v1970, 4294901760
        %2007 = vmatpush1.msra.mxu0 %v2006
        %v2008 = vand.u32 %v1973, 4294901760
        %2009 = vmatprep.subr.mxu0 %v2008
        %v2010 = vand.u32 %v1972, 4294901760
        %2011 = vmatpush1.msra.mxu0 %v2010
        %v2012 = vand.u32 %v1975, 4294901760
        %2013 = vmatprep.subr.mxu0 %v2012
        %v2014 = vand.u32 %v1974, 4294901760
        %2015 = vmatpush1.msra.mxu0 %v2014
        %2016 = vmatprep.subr.mxu0 0.0
        %2017 = vmatpush1.msra.mxu0 0.0
        %2018 = vmatprep.subr.mxu0 0.0
        %2019 = vmatpush1.msra.mxu0 0.0
        %2020 = vmatprep.subr.mxu0 0.0
        %2021 = vmatpush1.msra.mxu0 0.0
        %2022 = vmatprep.subr.mxu0 0.0
        %2023 = vmatpush1.msra.mxu0 0.0
        %2024 = vmatprep.subr.mxu0 0.0
        %2025 = vmatpush1.msra.mxu0 0.0
        %2026 = vmatprep.subr.mxu0 0.0
        %2027 = vmatpush1.msra.mxu0 0.0
        %2028 = vmatprep.subr.mxu0 0.0
        %2029 = vmatpush1.msra.mxu0 0.0
        %2030 = vmatprep.subr.mxu0 0.0
        %2031 = vmatpush1.msra.mxu0 0.0
        %2032 = vmatprep.subr.mxu0 0.0
        %2033 = vmatpush1.msra.mxu0 0.0
        %2034 = vmatprep.subr.mxu0 0.0
        %2035 = vmatpush1.msra.mxu0 0.0
        %2036 = vmatprep.subr.mxu0 0.0
        %2037 = vmatpush1.msra.mxu0 0.0
        %2038 = vmatprep.subr.mxu0 0.0
        %2039 = vmatpush1.msra.mxu0 0.0
        %2040 = vmatprep.subr.mxu0 0.0
        %2041 = vmatpush1.msra.mxu0 0.0
        %2042 = vmatprep.subr.mxu0 0.0
        %2043 = vmatpush1.msra.mxu0 0.0
        %2044 = vmatprep.subr.mxu0 0.0
        %2045 = vmatpush1.msra.mxu0 0.0
        %2046 = vmatprep.subr.mxu0 0.0
        %2047 = vmatpush1.msra.mxu0 0.0
        %2048 = vmatprep.subr.mxu0 0.0
        %2049 = vmatpush1.msra.mxu0 0.0
        %2050 = vmatprep.subr.mxu0 0.0
        %2051 = vmatpush1.msra.mxu0 0.0
        %2052 = vmatprep.subr.mxu0 0.0
        %2053 = vmatpush1.msra.mxu0 0.0
        %2054 = vmatprep.subr.mxu0 0.0
        %2055 = vmatpush1.msra.mxu0 0.0
        %2056 = vmatprep.subr.mxu0 0.0
        %2057 = vmatpush1.msra.mxu0 0.0
        %2058 = vmatprep.subr.mxu0 0.0
        %2059 = vmatpush1.msra.mxu0 0.0
        %2060 = vmatprep.subr.mxu0 0.0
        %2061 = vmatpush1.msra.mxu0 0.0
        %2062 = vmatprep.mubr.f32.mxu0 0.0
        %v2063 = vand.u32 %v1978, 4294901760
        %v2064 = vsub.f32 %v1978, %v2063
        %v2065 = vand.u32 %v2064, 4294901760
        %v2066 = vsub.f32 %v2064, %v2065
        %v2067 = vand.u32 %v2066, 4294901760
        %2068 = vmatmul.mubr.f32.gmra.mrb[0].mxu0 %v2067
        %v2069 = vpop.f32.mrb[0].mxu0
        %v2070 = vadd.f32 0.0, %v2069
        %v2071 = vpop.f32.mrb[0].mxu0
        %v2072 = vadd.f32 0.0, %v2071
        %2073 = vdwg.mxu0
        %v2074 = vand.u32 %v1959, 4294901760
        %v2075 = vsub.f32 %v1959, %v2074
        %v2076 = vand.u32 %v2075, 4294901760
        %v2077 = vsub.f32 %v2075, %v2076
        %v2078 = vand.u32 %v2077, 4294901760
        %2079 = vmatprep.subr.mxu0 %v2078
        %v2080 = vand.u32 %v1958, 4294901760
        %v2081 = vsub.f32 %v1958, %v2080
        %v2082 = vand.u32 %v2081, 4294901760
        %v2083 = vsub.f32 %v2081, %v2082
        %v2084 = vand.u32 %v2083, 4294901760
        %2085 = vmatpush1.msra.mxu0 %v2084
        %v2086 = vand.u32 %v1961, 4294901760
        %v2087 = vsub.f32 %v1961, %v2086
        %v2088 = vand.u32 %v2087, 4294901760
        %v2089 = vsub.f32 %v2087, %v2088
        %v2090 = vand.u32 %v2089, 4294901760
        %2091 = vmatprep.subr.mxu0 %v2090
        %v2092 = vand.u32 %v1960, 4294901760
        %v2093 = vsub.f32 %v1960, %v2092
        %v2094 = vand.u32 %v2093, 4294901760
        %v2095 = vsub.f32 %v2093, %v2094
        %v2096 = vand.u32 %v2095, 4294901760
        %2097 = vmatpush1.msra.mxu0 %v2096
        %v2098 = vand.u32 %v1963, 4294901760
        %v2099 = vsub.f32 %v1963, %v2098
        %v2100 = vand.u32 %v2099, 4294901760
        %v2101 = vsub.f32 %v2099, %v2100
        %v2102 = vand.u32 %v2101, 4294901760
        %2103 = vmatprep.subr.mxu0 %v2102
        %v2104 = vand.u32 %v1962, 4294901760
        %v2105 = vsub.f32 %v1962, %v2104
        %v2106 = vand.u32 %v2105, 4294901760
        %v2107 = vsub.f32 %v2105, %v2106
        %v2108 = vand.u32 %v2107, 4294901760
        %2109 = vmatpush1.msra.mxu0 %v2108
        %v2110 = vand.u32 %v1965, 4294901760
        %v2111 = vsub.f32 %v1965, %v2110
        %v2112 = vand.u32 %v2111, 4294901760
        %v2113 = vsub.f32 %v2111, %v2112
        %v2114 = vand.u32 %v2113, 4294901760
        %2115 = vmatprep.subr.mxu0 %v2114
        %v2116 = vand.u32 %v1964, 4294901760
        %v2117 = vsub.f32 %v1964, %v2116
        %v2118 = vand.u32 %v2117, 4294901760
        %v2119 = vsub.f32 %v2117, %v2118
        %v2120 = vand.u32 %v2119, 4294901760
        %2121 = vmatpush1.msra.mxu0 %v2120
        %v2122 = vand.u32 %v1967, 4294901760
        %v2123 = vsub.f32 %v1967, %v2122
        %v2124 = vand.u32 %v2123, 4294901760
        %v2125 = vsub.f32 %v2123, %v2124
        %v2126 = vand.u32 %v2125, 4294901760
        %2127 = vmatprep.subr.mxu0 %v2126
        %v2128 = vand.u32 %v1966, 4294901760
        %v2129 = vsub.f32 %v1966, %v2128
        %v2130 = vand.u32 %v2129, 4294901760
        %v2131 = vsub.f32 %v2129, %v2130
        %v2132 = vand.u32 %v2131, 4294901760
        %2133 = vmatpush1.msra.mxu0 %v2132
        %v2134 = vand.u32 %v1969, 4294901760
        %v2135 = vsub.f32 %v1969, %v2134
        %v2136 = vand.u32 %v2135, 4294901760
        %v2137 = vsub.f32 %v2135, %v2136
        %v2138 = vand.u32 %v2137, 4294901760
        %2139 = vmatprep.subr.mxu0 %v2138
        %v2140 = vand.u32 %v1968, 4294901760
        %v2141 = vsub.f32 %v1968, %v2140
        %v2142 = vand.u32 %v2141, 4294901760
        %v2143 = vsub.f32 %v2141, %v2142
        %v2144 = vand.u32 %v2143, 4294901760
        %2145 = vmatpush1.msra.mxu0 %v2144
        %v2146 = vand.u32 %v1971, 4294901760
        %v2147 = vsub.f32 %v1971, %v2146
        %v2148 = vand.u32 %v2147, 4294901760
        %v2149 = vsub.f32 %v2147, %v2148
        %v2150 = vand.u32 %v2149, 4294901760
        %2151 = vmatprep.subr.mxu0 %v2150
        %v2152 = vand.u32 %v1970, 4294901760
        %v2153 = vsub.f32 %v1970, %v2152
        %v2154 = vand.u32 %v2153, 4294901760
        %v2155 = vsub.f32 %v2153, %v2154
        %v2156 = vand.u32 %v2155, 4294901760
        %2157 = vmatpush1.msra.mxu0 %v2156
        %v2158 = vand.u32 %v1973, 4294901760
        %v2159 = vsub.f32 %v1973, %v2158
        %v2160 = vand.u32 %v2159, 4294901760
        %v2161 = vsub.f32 %v2159, %v2160
        %v2162 = vand.u32 %v2161, 4294901760
        %2163 = vmatprep.subr.mxu0 %v2162
        %v2164 = vand.u32 %v1972, 4294901760
        %v2165 = vsub.f32 %v1972, %v2164
        %v2166 = vand.u32 %v2165, 4294901760
        %v2167 = vsub.f32 %v2165, %v2166
        %v2168 = vand.u32 %v2167, 4294901760
        %2169 = vmatpush1.msra.mxu0 %v2168
        %v2170 = vand.u32 %v1975, 4294901760
        %v2171 = vsub.f32 %v1975, %v2170
        %v2172 = vand.u32 %v2171, 4294901760
        %v2173 = vsub.f32 %v2171, %v2172
        %v2174 = vand.u32 %v2173, 4294901760
        %2175 = vmatprep.subr.mxu0 %v2174
        %v2176 = vand.u32 %v1974, 4294901760
        %v2177 = vsub.f32 %v1974, %v2176
        %v2178 = vand.u32 %v2177, 4294901760
        %v2179 = vsub.f32 %v2177, %v2178
        %v2180 = vand.u32 %v2179, 4294901760
        %2181 = vmatpush1.msra.mxu0 %v2180
        %2182 = vmatprep.subr.mxu0 0.0
        %2183 = vmatpush1.msra.mxu0 0.0
        %2184 = vmatprep.subr.mxu0 0.0
        %2185 = vmatpush1.msra.mxu0 0.0
        %2186 = vmatprep.subr.mxu0 0.0
        %2187 = vmatpush1.msra.mxu0 0.0
        %2188 = vmatprep.subr.mxu0 0.0
        %2189 = vmatpush1.msra.mxu0 0.0
        %2190 = vmatprep.subr.mxu0 0.0
        %2191 = vmatpush1.msra.mxu0 0.0
        %2192 = vmatprep.subr.mxu0 0.0
        %2193 = vmatpush1.msra.mxu0 0.0
        %2194 = vmatprep.subr.mxu0 0.0
        %2195 = vmatpush1.msra.mxu0 0.0
        %2196 = vmatprep.subr.mxu0 0.0
        %2197 = vmatpush1.msra.mxu0 0.0
        %2198 = vmatprep.subr.mxu0 0.0
        %2199 = vmatpush1.msra.mxu0 0.0
        %2200 = vmatprep.subr.mxu0 0.0
        %2201 = vmatpush1.msra.mxu0 0.0
        %2202 = vmatprep.subr.mxu0 0.0
        %2203 = vmatpush1.msra.mxu0 0.0
        %2204 = vmatprep.subr.mxu0 0.0
        %2205 = vmatpush1.msra.mxu0 0.0
        %2206 = vmatprep.subr.mxu0 0.0
        %2207 = vmatpush1.msra.mxu0 0.0
        %2208 = vmatprep.subr.mxu0 0.0
        %2209 = vmatpush1.msra.mxu0 0.0
        %2210 = vmatprep.subr.mxu0 0.0
        %2211 = vmatpush1.msra.mxu0 0.0
        %2212 = vmatprep.subr.mxu0 0.0
        %2213 = vmatpush1.msra.mxu0 0.0
        %2214 = vmatprep.subr.mxu0 0.0
        %2215 = vmatpush1.msra.mxu0 0.0
        %2216 = vmatprep.subr.mxu0 0.0
        %2217 = vmatpush1.msra.mxu0 0.0
        %2218 = vmatprep.subr.mxu0 0.0
        %2219 = vmatpush1.msra.mxu0 0.0
        %2220 = vmatprep.subr.mxu0 0.0
        %2221 = vmatpush1.msra.mxu0 0.0
        %2222 = vmatprep.subr.mxu0 0.0
        %2223 = vmatpush1.msra.mxu0 0.0
        %2224 = vmatprep.subr.mxu0 0.0
        %2225 = vmatpush1.msra.mxu0 0.0
        %2226 = vmatprep.subr.mxu0 0.0
        %2227 = vmatpush1.msra.mxu0 0.0
        %2228 = vmatprep.mubr.f32.mxu0 0.0
        %v2229 = vand.u32 %v1978, 4294901760
        %2230 = vmatmul.mubr.f32.gmra.mrb[0].mxu0 %v2229
        %v2231 = vpop.f32.mrb[0].mxu0
        %v2232 = vadd.f32 %v2070, %v2231
        %v2233 = vpop.f32.mrb[0].mxu0
        %v2234 = vadd.f32 %v2072, %v2233
        %2235 = vdwg.mxu0
        %v2236 = vand.u32 %v1959, 4294901760
        %v2237 = vsub.f32 %v1959, %v2236
        %2238 = vmatprep.subr.mxu0 %v2237
        %v2239 = vand.u32 %v1958, 4294901760
        %v2240 = vsub.f32 %v1958, %v2239
        %2241 = vmatpush1.msra.mxu0 %v2240
        %v2242 = vand.u32 %v1961, 4294901760
        %v2243 = vsub.f32 %v1961, %v2242
        %2244 = vmatprep.subr.mxu0 %v2243
        %v2245 = vand.u32 %v1960, 4294901760
        %v2246 = vsub.f32 %v1960, %v2245
        %2247 = vmatpush1.msra.mxu0 %v2246
        %v2248 = vand.u32 %v1963, 4294901760
        %v2249 = vsub.f32 %v1963, %v2248
        %2250 = vmatprep.subr.mxu0 %v2249
        %v2251 = vand.u32 %v1962, 4294901760
        %v2252 = vsub.f32 %v1962, %v2251
        %2253 = vmatpush1.msra.mxu0 %v2252
        %v2254 = vand.u32 %v1965, 4294901760
        %v2255 = vsub.f32 %v1965, %v2254
        %2256 = vmatprep.subr.mxu0 %v2255
        %v2257 = vand.u32 %v1964, 4294901760
        %v2258 = vsub.f32 %v1964, %v2257
        %2259 = vmatpush1.msra.mxu0 %v2258
        %v2260 = vand.u32 %v1967, 4294901760
        %v2261 = vsub.f32 %v1967, %v2260
        %2262 = vmatprep.subr.mxu0 %v2261
        %v2263 = vand.u32 %v1966, 4294901760
        %v2264 = vsub.f32 %v1966, %v2263
        %2265 = vmatpush1.msra.mxu0 %v2264
        %v2266 = vand.u32 %v1969, 4294901760
        %v2267 = vsub.f32 %v1969, %v2266
        %2268 = vmatprep.subr.mxu0 %v2267
        %v2269 = vand.u32 %v1968, 4294901760
        %v2270 = vsub.f32 %v1968, %v2269
        %2271 = vmatpush1.msra.mxu0 %v2270
        %v2272 = vand.u32 %v1971, 4294901760
        %v2273 = vsub.f32 %v1971, %v2272
        %2274 = vmatprep.subr.mxu0 %v2273
        %v2275 = vand.u32 %v1970, 4294901760
        %v2276 = vsub.f32 %v1970, %v2275
        %2277 = vmatpush1.msra.mxu0 %v2276
        %v2278 = vand.u32 %v1973, 4294901760
        %v2279 = vsub.f32 %v1973, %v2278
        %2280 = vmatprep.subr.mxu0 %v2279
        %v2281 = vand.u32 %v1972, 4294901760
        %v2282 = vsub.f32 %v1972, %v2281
        %2283 = vmatpush1.msra.mxu0 %v2282
        %v2284 = vand.u32 %v1975, 4294901760
        %v2285 = vsub.f32 %v1975, %v2284
        %2286 = vmatprep.subr.mxu0 %v2285
        %v2287 = vand.u32 %v1974, 4294901760
        %v2288 = vsub.f32 %v1974, %v2287
        %2289 = vmatpush1.msra.mxu0 %v2288
        %2290 = vmatprep.subr.mxu0 0.0
        %2291 = vmatpush1.msra.mxu0 0.0
        %2292 = vmatprep.subr.mxu0 0.0
        %2293 = vmatpush1.msra.mxu0 0.0
        %2294 = vmatprep.subr.mxu0 0.0
        %2295 = vmatpush1.msra.mxu0 0.0
        %2296 = vmatprep.subr.mxu0 0.0
        %2297 = vmatpush1.msra.mxu0 0.0
        %2298 = vmatprep.subr.mxu0 0.0
        %2299 = vmatpush1.msra.mxu0 0.0
        %2300 = vmatprep.subr.mxu0 0.0
        %2301 = vmatpush1.msra.mxu0 0.0
        %2302 = vmatprep.subr.mxu0 0.0
        %2303 = vmatpush1.msra.mxu0 0.0
        %2304 = vmatprep.subr.mxu0 0.0
        %2305 = vmatpush1.msra.mxu0 0.0
        %2306 = vmatprep.subr.mxu0 0.0
        %2307 = vmatpush1.msra.mxu0 0.0
        %2308 = vmatprep.subr.mxu0 0.0
        %2309 = vmatpush1.msra.mxu0 0.0
        %2310 = vmatprep.subr.mxu0 0.0
        %2311 = vmatpush1.msra.mxu0 0.0
        %2312 = vmatprep.subr.mxu0 0.0
        %2313 = vmatpush1.msra.mxu0 0.0
        %2314 = vmatprep.subr.mxu0 0.0
        %2315 = vmatpush1.msra.mxu0 0.0
        %2316 = vmatprep.subr.mxu0 0.0
        %2317 = vmatpush1.msra.mxu0 0.0
        %2318 = vmatprep.subr.mxu0 0.0
        %2319 = vmatpush1.msra.mxu0 0.0
        %2320 = vmatprep.subr.mxu0 0.0
        %2321 = vmatpush1.msra.mxu0 0.0
        %2322 = vmatprep.subr.mxu0 0.0
        %2323 = vmatpush1.msra.mxu0 0.0
        %2324 = vmatprep.subr.mxu0 0.0
        %2325 = vmatpush1.msra.mxu0 0.0
        %2326 = vmatprep.subr.mxu0 0.0
        %2327 = vmatpush1.msra.mxu0 0.0
        %2328 = vmatprep.subr.mxu0 0.0
        %2329 = vmatpush1.msra.mxu0 0.0
        %2330 = vmatprep.subr.mxu0 0.0
        %2331 = vmatpush1.msra.mxu0 0.0
        %2332 = vmatprep.subr.mxu0 0.0
        %2333 = vmatpush1.msra.mxu0 0.0
        %2334 = vmatprep.subr.mxu0 0.0
        %2335 = vmatpush1.msra.mxu0 0.0
        %2336 = vmatprep.mubr.f32.mxu0 0.0
        %v2337 = vand.u32 %v1978, 4294901760
        %v2338 = vsub.f32 %v1978, %v2337
        %2339 = vmatmul.mubr.f32.gmra.mrb[0].mxu0 %v2338
        %v2340 = vpop.f32.mrb[0].mxu0
        %v2341 = vadd.f32 %v2232, %v2340
        %v2342 = vpop.f32.mrb[0].mxu0
        %v2343 = vadd.f32 %v2234, %v2342
        %2344 = vdwg.mxu0
        %v2345 = vand.u32 %v1959, 4294901760
        %2346 = vmatprep.subr.mxu0 %v2345
        %v2347 = vand.u32 %v1958, 4294901760
        %2348 = vmatpush1.msra.mxu0 %v2347
        %v2349 = vand.u32 %v1961, 4294901760
        %2350 = vmatprep.subr.mxu0 %v2349
        %v2351 = vand.u32 %v1960, 4294901760
        %2352 = vmatpush1.msra.mxu0 %v2351
        %v2353 = vand.u32 %v1963, 4294901760
        %2354 = vmatprep.subr.mxu0 %v2353
        %v2355 = vand.u32 %v1962, 4294901760
        %2356 = vmatpush1.msra.mxu0 %v2355
        %v2357 = vand.u32 %v1965, 4294901760
        %2358 = vmatprep.subr.mxu0 %v2357
        %v2359 = vand.u32 %v1964, 4294901760
        %2360 = vmatpush1.msra.mxu0 %v2359
        %v2361 = vand.u32 %v1967, 4294901760
        %2362 = vmatprep.subr.mxu0 %v2361
        %v2363 = vand.u32 %v1966, 4294901760
        %2364 = vmatpush1.msra.mxu0 %v2363
        %v2365 = vand.u32 %v1969, 4294901760
        %2366 = vmatprep.subr.mxu0 %v2365
        %v2367 = vand.u32 %v1968, 4294901760
        %2368 = vmatpush1.msra.mxu0 %v2367
        %v2369 = vand.u32 %v1971, 4294901760
        %2370 = vmatprep.subr.mxu0 %v2369
        %v2371 = vand.u32 %v1970, 4294901760
        %2372 = vmatpush1.msra.mxu0 %v2371
        %v2373 = vand.u32 %v1973, 4294901760
        %2374 = vmatprep.subr.mxu0 %v2373
        %v2375 = vand.u32 %v1972, 4294901760
        %2376 = vmatpush1.msra.mxu0 %v2375
        %v2377 = vand.u32 %v1975, 4294901760
        %2378 = vmatprep.subr.mxu0 %v2377
        %v2379 = vand.u32 %v1974, 4294901760
        %2380 = vmatpush1.msra.mxu0 %v2379
        %2381 = vmatprep.subr.mxu0 0.0
        %2382 = vmatpush1.msra.mxu0 0.0
        %2383 = vmatprep.subr.mxu0 0.0
        %2384 = vmatpush1.msra.mxu0 0.0
        %2385 = vmatprep.subr.mxu0 0.0
        %2386 = vmatpush1.msra.mxu0 0.0
        %2387 = vmatprep.subr.mxu0 0.0
        %2388 = vmatpush1.msra.mxu0 0.0
        %2389 = vmatprep.subr.mxu0 0.0
        %2390 = vmatpush1.msra.mxu0 0.0
        %2391 = vmatprep.subr.mxu0 0.0
        %2392 = vmatpush1.msra.mxu0 0.0
        %2393 = vmatprep.subr.mxu0 0.0
        %2394 = vmatpush1.msra.mxu0 0.0
        %2395 = vmatprep.subr.mxu0 0.0
        %2396 = vmatpush1.msra.mxu0 0.0
        %2397 = vmatprep.subr.mxu0 0.0
        %2398 = vmatpush1.msra.mxu0 0.0
        %2399 = vmatprep.subr.mxu0 0.0
        %2400 = vmatpush1.msra.mxu0 0.0
        %2401 = vmatprep.subr.mxu0 0.0
        %2402 = vmatpush1.msra.mxu0 0.0
        %2403 = vmatprep.subr.mxu0 0.0
        %2404 = vmatpush1.msra.mxu0 0.0
        %2405 = vmatprep.subr.mxu0 0.0
        %2406 = vmatpush1.msra.mxu0 0.0
        %2407 = vmatprep.subr.mxu0 0.0
        %2408 = vmatpush1.msra.mxu0 0.0
        %2409 = vmatprep.subr.mxu0 0.0
        %2410 = vmatpush1.msra.mxu0 0.0
        %2411 = vmatprep.subr.mxu0 0.0
        %2412 = vmatpush1.msra.mxu0 0.0
        %2413 = vmatprep.subr.mxu0 0.0
        %2414 = vmatpush1.msra.mxu0 0.0
        %2415 = vmatprep.subr.mxu0 0.0
        %2416 = vmatpush1.msra.mxu0 0.0
        %2417 = vmatprep.subr.mxu0 0.0
        %2418 = vmatpush1.msra.mxu0 0.0
        %2419 = vmatprep.subr.mxu0 0.0
        %2420 = vmatpush1.msra.mxu0 0.0
        %2421 = vmatprep.subr.mxu0 0.0
        %2422 = vmatpush1.msra.mxu0 0.0
        %2423 = vmatprep.subr.mxu0 0.0
        %2424 = vmatpush1.msra.mxu0 0.0
        %2425 = vmatprep.subr.mxu0 0.0
        %2426 = vmatpush1.msra.mxu0 0.0
        %2427 = vmatprep.mubr.f32.mxu0 0.0
        %v2428 = vand.u32 %v1978, 4294901760
        %v2429 = vsub.f32 %v1978, %v2428
        %v2430 = vand.u32 %v2429, 4294901760
        %2431 = vmatmul.mubr.f32.gmra.mrb[0].mxu0 %v2430
        %v2432 = vpop.f32.mrb[0].mxu0
        %v2433 = vadd.f32 %v2341, %v2432
        %v2434 = vpop.f32.mrb[0].mxu0
        %v2435 = vadd.f32 %v2343, %v2434
        %2436 = vdwg.mxu0
        %v2437 = vand.u32 %v1959, 4294901760
        %v2438 = vsub.f32 %v1959, %v2437
        %v2439 = vand.u32 %v2438, 4294901760
        %2440 = vmatprep.subr.mxu0 %v2439
        %v2441 = vand.u32 %v1958, 4294901760
        %v2442 = vsub.f32 %v1958, %v2441
        %v2443 = vand.u32 %v2442, 4294901760
        %2444 = vmatpush1.msra.mxu0 %v2443
        %v2445 = vand.u32 %v1961, 4294901760
        %v2446 = vsub.f32 %v1961, %v2445
        %v2447 = vand.u32 %v2446, 4294901760
        %2448 = vmatprep.subr.mxu0 %v2447
        %v2449 = vand.u32 %v1960, 4294901760
        %v2450 = vsub.f32 %v1960, %v2449
        %v2451 = vand.u32 %v2450, 4294901760
        %2452 = vmatpush1.msra.mxu0 %v2451
        %v2453 = vand.u32 %v1963, 4294901760
        %v2454 = vsub.f32 %v1963, %v2453
        %v2455 = vand.u32 %v2454, 4294901760
        %2456 = vmatprep.subr.mxu0 %v2455
        %v2457 = vand.u32 %v1962, 4294901760
        %v2458 = vsub.f32 %v1962, %v2457
        %v2459 = vand.u32 %v2458, 4294901760
        %2460 = vmatpush1.msra.mxu0 %v2459
        %v2461 = vand.u32 %v1965, 4294901760
        %v2462 = vsub.f32 %v1965, %v2461
        %v2463 = vand.u32 %v2462, 4294901760
        %2464 = vmatprep.subr.mxu0 %v2463
        %v2465 = vand.u32 %v1964, 4294901760
        %v2466 = vsub.f32 %v1964, %v2465
        %v2467 = vand.u32 %v2466, 4294901760
        %2468 = vmatpush1.msra.mxu0 %v2467
        %v2469 = vand.u32 %v1967, 4294901760
        %v2470 = vsub.f32 %v1967, %v2469
        %v2471 = vand.u32 %v2470, 4294901760
        %2472 = vmatprep.subr.mxu0 %v2471
        %v2473 = vand.u32 %v1966, 4294901760
        %v2474 = vsub.f32 %v1966, %v2473
        %v2475 = vand.u32 %v2474, 4294901760
        %2476 = vmatpush1.msra.mxu0 %v2475
        %v2477 = vand.u32 %v1969, 4294901760
        %v2478 = vsub.f32 %v1969, %v2477
        %v2479 = vand.u32 %v2478, 4294901760
        %2480 = vmatprep.subr.mxu0 %v2479
        %v2481 = vand.u32 %v1968, 4294901760
        %v2482 = vsub.f32 %v1968, %v2481
        %v2483 = vand.u32 %v2482, 4294901760
        %2484 = vmatpush1.msra.mxu0 %v2483
        %v2485 = vand.u32 %v1971, 4294901760
        %v2486 = vsub.f32 %v1971, %v2485
        %v2487 = vand.u32 %v2486, 4294901760
        %2488 = vmatprep.subr.mxu0 %v2487
        %v2489 = vand.u32 %v1970, 4294901760
        %v2490 = vsub.f32 %v1970, %v2489
        %v2491 = vand.u32 %v2490, 4294901760
        %2492 = vmatpush1.msra.mxu0 %v2491
        %v2493 = vand.u32 %v1973, 4294901760
        %v2494 = vsub.f32 %v1973, %v2493
        %v2495 = vand.u32 %v2494, 4294901760
        %2496 = vmatprep.subr.mxu0 %v2495
        %v2497 = vand.u32 %v1972, 4294901760
        %v2498 = vsub.f32 %v1972, %v2497
        %v2499 = vand.u32 %v2498, 4294901760
        %2500 = vmatpush1.msra.mxu0 %v2499
        %v2501 = vand.u32 %v1975, 4294901760
        %v2502 = vsub.f32 %v1975, %v2501
        %v2503 = vand.u32 %v2502, 4294901760
        %2504 = vmatprep.subr.mxu0 %v2503
        %v2505 = vand.u32 %v1974, 4294901760
        %v2506 = vsub.f32 %v1974, %v2505
        %v2507 = vand.u32 %v2506, 4294901760
        %2508 = vmatpush1.msra.mxu0 %v2507
        %2509 = vmatprep.subr.mxu0 0.0
        %2510 = vmatpush1.msra.mxu0 0.0
        %2511 = vmatprep.subr.mxu0 0.0
        %2512 = vmatpush1.msra.mxu0 0.0
        %2513 = vmatprep.subr.mxu0 0.0
        %2514 = vmatpush1.msra.mxu0 0.0
        %2515 = vmatprep.subr.mxu0 0.0
        %2516 = vmatpush1.msra.mxu0 0.0
        %2517 = vmatprep.subr.mxu0 0.0
        %2518 = vmatpush1.msra.mxu0 0.0
        %2519 = vmatprep.subr.mxu0 0.0
        %2520 = vmatpush1.msra.mxu0 0.0
        %2521 = vmatprep.subr.mxu0 0.0
        %2522 = vmatpush1.msra.mxu0 0.0
        %2523 = vmatprep.subr.mxu0 0.0
        %2524 = vmatpush1.msra.mxu0 0.0
        %2525 = vmatprep.subr.mxu0 0.0
        %2526 = vmatpush1.msra.mxu0 0.0
        %2527 = vmatprep.subr.mxu0 0.0
        %2528 = vmatpush1.msra.mxu0 0.0
        %2529 = vmatprep.subr.mxu0 0.0
        %2530 = vmatpush1.msra.mxu0 0.0
        %2531 = vmatprep.subr.mxu0 0.0
        %2532 = vmatpush1.msra.mxu0 0.0
        %2533 = vmatprep.subr.mxu0 0.0
        %2534 = vmatpush1.msra.mxu0 0.0
        %2535 = vmatprep.subr.mxu0 0.0
        %2536 = vmatpush1.msra.mxu0 0.0
        %2537 = vmatprep.subr.mxu0 0.0
        %2538 = vmatpush1.msra.mxu0 0.0
        %2539 = vmatprep.subr.mxu0 0.0
        %2540 = vmatpush1.msra.mxu0 0.0
        %2541 = vmatprep.subr.mxu0 0.0
        %2542 = vmatpush1.msra.mxu0 0.0
        %2543 = vmatprep.subr.mxu0 0.0
        %2544 = vmatpush1.msra.mxu0 0.0
        %2545 = vmatprep.subr.mxu0 0.0
        %2546 = vmatpush1.msra.mxu0 0.0
        %2547 = vmatprep.subr.mxu0 0.0
        %2548 = vmatpush1.msra.mxu0 0.0
        %2549 = vmatprep.subr.mxu0 0.0
        %2550 = vmatpush1.msra.mxu0 0.0
        %2551 = vmatprep.subr.mxu0 0.0
        %2552 = vmatpush1.msra.mxu0 0.0
        %2553 = vmatprep.subr.mxu0 0.0
        %2554 = vmatpush1.msra.mxu0 0.0
        %2555 = vmatprep.mubr.f32.mxu0 0.0
        %v2556 = vand.u32 %v1978, 4294901760
        %2557 = vmatmul.mubr.f32.gmra.mrb[0].mxu0 %v2556
        %v2558 = vpop.f32.mrb[0].mxu0
        %v2559 = vadd.f32 %v2433, %v2558
        %v2560 = vpop.f32.mrb[0].mxu0
        %v2561 = vadd.f32 %v2435, %v2560
        %2562 = vdwg.mxu0
        %v2563 = vand.u32 %v1959, 4294901760
        %2564 = vmatprep.subr.mxu0 %v2563
        %v2565 = vand.u32 %v1958, 4294901760
        %2566 = vmatpush1.msra.mxu0 %v2565
        %v2567 = vand.u32 %v1961, 4294901760
        %2568 = vmatprep.subr.mxu0 %v2567
        %v2569 = vand.u32 %v1960, 4294901760
        %2570 = vmatpush1.msra.mxu0 %v2569
        %v2571 = vand.u32 %v1963, 4294901760
        %2572 = vmatprep.subr.mxu0 %v2571
        %v2573 = vand.u32 %v1962, 4294901760
        %2574 = vmatpush1.msra.mxu0 %v2573
        %v2575 = vand.u32 %v1965, 4294901760
        %2576 = vmatprep.subr.mxu0 %v2575
        %v2577 = vand.u32 %v1964, 4294901760
        %2578 = vmatpush1.msra.mxu0 %v2577
        %v2579 = vand.u32 %v1967, 4294901760
        %2580 = vmatprep.subr.mxu0 %v2579
        %v2581 = vand.u32 %v1966, 4294901760
        %2582 = vmatpush1.msra.mxu0 %v2581
        %v2583 = vand.u32 %v1969, 4294901760
        %2584 = vmatprep.subr.mxu0 %v2583
        %v2585 = vand.u32 %v1968, 4294901760
        %2586 = vmatpush1.msra.mxu0 %v2585
        %v2587 = vand.u32 %v1971, 4294901760
        %2588 = vmatprep.subr.mxu0 %v2587
        %v2589 = vand.u32 %v1970, 4294901760
        %2590 = vmatpush1.msra.mxu0 %v2589
        %v2591 = vand.u32 %v1973, 4294901760
        %2592 = vmatprep.subr.mxu0 %v2591
        %v2593 = vand.u32 %v1972, 4294901760
        %2594 = vmatpush1.msra.mxu0 %v2593
        %v2595 = vand.u32 %v1975, 4294901760
        %2596 = vmatprep.subr.mxu0 %v2595
        %v2597 = vand.u32 %v1974, 4294901760
        %2598 = vmatpush1.msra.mxu0 %v2597
        %2599 = vmatprep.subr.mxu0 0.0
        %2600 = vmatpush1.msra.mxu0 0.0
        %2601 = vmatprep.subr.mxu0 0.0
        %2602 = vmatpush1.msra.mxu0 0.0
        %2603 = vmatprep.subr.mxu0 0.0
        %2604 = vmatpush1.msra.mxu0 0.0
        %2605 = vmatprep.subr.mxu0 0.0
        %2606 = vmatpush1.msra.mxu0 0.0
        %2607 = vmatprep.subr.mxu0 0.0
        %2608 = vmatpush1.msra.mxu0 0.0
        %2609 = vmatprep.subr.mxu0 0.0
        %2610 = vmatpush1.msra.mxu0 0.0
        %2611 = vmatprep.subr.mxu0 0.0
        %2612 = vmatpush1.msra.mxu0 0.0
        %2613 = vmatprep.subr.mxu0 0.0
        %2614 = vmatpush1.msra.mxu0 0.0
        %2615 = vmatprep.subr.mxu0 0.0
        %2616 = vmatpush1.msra.mxu0 0.0
        %2617 = vmatprep.subr.mxu0 0.0
        %2618 = vmatpush1.msra.mxu0 0.0
        %2619 = vmatprep.subr.mxu0 0.0
        %2620 = vmatpush1.msra.mxu0 0.0
        %2621 = vmatprep.subr.mxu0 0.0
        %2622 = vmatpush1.msra.mxu0 0.0
        %2623 = vmatprep.subr.mxu0 0.0
        %2624 = vmatpush1.msra.mxu0 0.0
        %2625 = vmatprep.subr.mxu0 0.0
        %2626 = vmatpush1.msra.mxu0 0.0
        %2627 = vmatprep.subr.mxu0 0.0
        %2628 = vmatpush1.msra.mxu0 0.0
        %2629 = vmatprep.subr.mxu0 0.0
        %2630 = vmatpush1.msra.mxu0 0.0
        %2631 = vmatprep.subr.mxu0 0.0
        %2632 = vmatpush1.msra.mxu0 0.0
        %2633 = vmatprep.subr.mxu0 0.0
        %2634 = vmatpush1.msra.mxu0 0.0
        %2635 = vmatprep.subr.mxu0 0.0
        %2636 = vmatpush1.msra.mxu0 0.0
        %2637 = vmatprep.subr.mxu0 0.0
        %2638 = vmatpush1.msra.mxu0 0.0
        %2639 = vmatprep.subr.mxu0 0.0
        %2640 = vmatpush1.msra.mxu0 0.0
        %2641 = vmatprep.subr.mxu0 0.0
        %2642 = vmatpush1.msra.mxu0 0.0
        %2643 = vmatprep.subr.mxu0 0.0
        %2644 = vmatpush1.msra.mxu0 0.0
        %2645 = vmatprep.mubr.f32.mxu0 0.0
        %v2646 = vand.u32 %v1978, 4294901760
        %2647 = vmatmul.mubr.f32.gmra.mrb[0].mxu0 %v2646
        %v2648 = vpop.f32.mrb[0].mxu0
        %v2649 = vadd.f32 %v2559, %v2648
        %v2650 = vpop.f32.mrb[0].mxu0
        %v2651 = vadd.f32 %v2561, %v2650
        %2652 = vdwg.mxu0
        %v2653 = vadd.f32 %v1733, %v2649
        %v2654 = vadd.f32 %v1735, %v2651
        %v2655 = vld [vmem:[%s6] sm:$0xff]
        %2657 = vset.pattern.permute.xlu0 0
        %2658 = vperm.xlu0 %2657, %v2655
        %v2659 = vpop.permute.xlu0 %2658
        %v2661 = vadd.f32 %v2653, %v2659
        %v2662 = vadd.f32 %v2654, %v2659
        %v2663 = vtanh.pop %v2661
        %v2664 = vtanh.pop %v2662
        %v2665 = vsub.f32 1.0, %v1770
        %v2666 = vsub.f32 1.0, %v1772
        %v2667 = vmul.f32 %v2665, %v348
        %v2668 = vmul.f32 %v2666, %v349
        %v2669 = vmul.f32 %v1770, %v2663
        %v2670 = vmul.f32 %v1772, %v2664
        %v2671 = vadd.f32 %v2667, %v2669
        %v2672 = vadd.f32 %v2668, %v2670
        %2673 = vst [vmem:[%s346] sm:$0xff] %v2671
        %2674 = vst [vmem:[%s346 + $0x8] sm:$0xff] %v2672
        %s2675 = sand.u32 %s192, 1
        %s2676 = scalar_lea.sflag [#allocation6], %s2675
        %s2677 = sand.u32 %s192, 1
        %s2678 = smul.addr %s2677, 16
        %s2679 = scalar_lea.vmem [#allocation10], %s2678
        // Predicated region
        $region61: #{tpu_custom_call.1} parent=47 // pred_check
          %p2680 = pneg %p202
        $region62: #{tpu_custom_call.1} parent=47 // pred_check_branch
          %2682 = sbr.rel (%p2680) target = $region64
        $region63: #{tpu_custom_call.1} parent=47 // pred_region
          %s2684 = ssub.s32 256, 256
          %2685 = vsyncadd %s2676, %s2684
          %s2686 = smul.addr %s27, 2
          %s2687 = smul.addr %s2686, 128
          %s2688 = scalar_lea.hbm %s7, %s2687
          %s2690 = sshll.u32 %s2679, 4
          %s2691 = int_to_ptr.vmem [resolvable:$true] %s2690
          %2693 = dma.vmem_to_hbm [thread:$0]  %s2691, 256, %s2688, %s2676
        $region64: #{tpu_custom_call.1} parent=47 // pred_fallthru
          _
      $region48: #{tpu_custom_call.1} parent=5 // pred_fallthru
        _
      %p2694 = scmp.le.s32.totalorder 2, %s22
      // Predicated region
      $region65: #{tpu_custom_call.1} parent=5 // pred_check
        %p2695 = pneg %p2694
      $region66: #{tpu_custom_call.1} parent=5 // pred_check_branch
        %2697 = sbr.rel (%p2695) target = $region68
      $region67: #{tpu_custom_call.1} parent=5 // pred_region
        %s2698 = ssub.s32 %s22, 2
        // Predicated region
        $region69: #{tpu_custom_call.1} parent=67 // pred_check
          %p2699 = pneg %p208
        $region70: #{tpu_custom_call.1} parent=67 // pred_check_branch
          %2701 = sbr.rel (%p2699) target = $region72
        $region71: #{tpu_custom_call.1} parent=67 // pred_region
          %s2702 = sand.u32 %s193, 1
          %s2703 = scalar_lea.sflag [#allocation6], %s2702
          %s2704 = sand.u32 %s193, 1
          %s2705 = smul.addr %s2704, 16
          %s2706 = scalar_lea.vmem [#allocation10], %s2705
          %2707 = dma.done %s2703, 256
        $region72: #{tpu_custom_call.1} parent=67 // pred_fallthru
          _
      $region68: #{tpu_custom_call.1} parent=5 // pred_fallthru
        _
    $region6: #{tpu_custom_call.1} parent=1 // loop_footer
      %s26 = sadd.s32 1, %s22
    $region7: #{tpu_custom_call.1} parent=1 // loop_footer_branch
      %21 = sbr.rel target = $region3
    $region8: #{tpu_custom_call.1} parent=1 // loop_exit
      _
    %2708 = vsyncpa [#allocation5], 1
    %s2709 = scalar_lea.sflag [#allocation5], 1
    %2710 = vsyncpa %s2709, 1
    %2711 = vsyncpa [#allocation8], 1
    %s2712 = scalar_lea.sflag [#allocation8], 1
    %2713 = vsyncpa %s2712, 1
    %2714 = vsyncpa [#allocation6], 1
    %s2715 = scalar_lea.sflag [#allocation6], 1
    %2716 = vsyncpa %s2715, 1

</llo_original>
